<compile_context>
chip_gen: v6e
topology: v6e:2x2x1
jax: 0.10.0
libtpu: 0.0.40
codegen_flags: <defaults>
</compile_context>

<pallas_src>
import functools

import jax
import jax.numpy as jnp
from jax.experimental import pallas as pl
from jax.experimental.pallas import tpu as pltpu

IN_DIM = 100          # x features / p features
PAD_DIM = 128         # lane-dense slab width
NOISE_OFF = IN_DIM    # noise packed into input-slab lanes 100..101
STATS_OFF = IN_DIM    # stats packed into output-slab lanes 100..109


def _vae_kernel(xn_ref,
                ew1, eb1, ew2, eb2, ew3, eb3, ew4, eb4,
                dw1, db1, dw2, db2, dw3, db3,
                out_ref):
    f32 = jnp.float32

    xn = xn_ref[...].astype(f32)                               # (TB, 128): x | noise | 0

    # -------- encoder: 128(=100 zero-padded) -> 64 -> 32 -> 16 -> 8 (MXU, f32 acc) -------
    h = jnp.maximum(jnp.dot(xn, ew1[...], preferred_element_type=f32) + eb1[...], 0.0)
    h = jnp.maximum(jnp.dot(h, ew2[...], preferred_element_type=f32) + eb2[...], 0.0)
    h = jnp.maximum(jnp.dot(h, ew3[...], preferred_element_type=f32) + eb3[...], 0.0)
    enc = jnp.dot(h, ew4[...], preferred_element_type=f32) + eb4[...]          # (TB, 8)

    # -------- latent stats (all in vregs, no VMEM round-trip) ----------------------------
    mus = enc[:, 0:2]                      # (TB, 2)
    lv = enc[:, 2:4]                       # (TB, 2) diagonal log-variances
    e = jnp.exp(0.5 * lv)                  # diagonal of L
    e0, e1 = e[:, 0:1], e[:, 1:2]
    # L_mask = [[0,0],[1,0]] keeps only L_prime[1,0] = enc[:, 6]
    l10 = enc[:, 6:7]

    n0 = xn[:, NOISE_OFF:NOISE_OFF + 1]
    n1 = xn[:, NOISE_OFF + 1:NOISE_OFF + 2]
    # z = mu + L @ noise, with L = [[e0, 0], [l10, e1]]
    z0 = mus[:, 0:1] + e0 * n0
    z1 = mus[:, 1:2] + l10 * n0 + e1 * n1

    # -------- decoder: 2 -> 32 -> 64 -> 128(=100 zero-padded), exact sigmoid -------------
    w1 = dw1[...]                                              # (2, 32): VPU outer product
    y = jnp.maximum(z0 * w1[0:1, :] + z1 * w1[1:2, :] + db1[...], 0.0)
    y = jnp.maximum(jnp.dot(y, dw2[...], preferred_element_type=f32) + db2[...], 0.0)
    logits = jnp.dot(y, dw3[...], preferred_element_type=f32) + db3[...]       # (TB, 128)
    sig = 1.0 / (1.0 + jnp.exp(-logits))                       # EUP exp, exact reciprocal

    # Single lane-dense store: [p(100) | mu0 mu1 lv0 lv1 L00 L01 L10 L11 z0 z1 | 18 pad].
    zeros1 = jnp.zeros_like(e0)
    stats = jnp.concatenate([mus, lv, e0, zeros1, l10, e1, z0, z1], axis=-1)   # (TB, 10)
    out_ref[...] = jnp.concatenate(
        [sig[:, :IN_DIM], stats, sig[:, IN_DIM + 10:]], axis=-1)


def _round_up(n, m):
    return -(-n // m) * m


@functools.partial(jax.jit, static_argnames=("tb",))
def vae_forward(x, noise, params, *, tb=4096):
    """Returns (mus, diag_logvars, L, noise, z, p) matching the PyTorch module.

    `noise` is the N(0, I) sample drawn outside the kernel. It travels in the bf16 input
    slab, so the returned noise is the bf16-rounded value actually used (z is consistent
    with it).
    """
    B = x.shape[0]
    (ew1, eb1, ew2, eb2, ew3, eb3, ew4, eb4,
     dw1, db1, dw2, db2, dw3, db3) = [p_.astype(jnp.float32) for p_ in params]

    # Zero-pad encoder input rows to 128 (padded lanes are inert) and the final decoder
    # layer to 128 output lanes (unmasked, lane-dense output store).
    ew1p = jnp.pad(ew1, ((0, PAD_DIM - ew1.shape[0]), (0, 0)))
    dw3p = jnp.pad(dw3, ((0, 0), (0, PAD_DIM - dw3.shape[1])))
    db3p = jnp.pad(db3, ((0, 0), (0, PAD_DIM - db3.shape[1])))
    kernel_params = (ew1p, eb1, ew2, eb2, ew3, eb3, ew4, eb4,
                     dw1, db1, dw2, db2, dw3p, db3p)

    # Single lane-dense bf16 input slab: [x(100) | noise(2) | 26 zero lanes].
    xn = jnp.concatenate(
        [x.astype(jnp.float32), noise.astype(jnp.float32),
         jnp.zeros((B, PAD_DIM - IN_DIM - 2), jnp.float32)],
        axis=-1).astype(jnp.bfloat16)
    noise_used = xn[:, NOISE_OFF:NOISE_OFF + 2].astype(jnp.float32)

    # Batch tiling: Bp multiple of 8; >=2 grid steps when B >= 16 (keeps both v7x TCs busy).
    Bp8 = _round_up(B, 8)
    steps = max(1 if Bp8 < 16 else 2, -(-Bp8 // tb))
    TB = _round_up(-(-Bp8 // steps), 8)
    Bp = steps * TB
    if Bp != B:
        xn = jnp.pad(xn, ((0, Bp - B), (0, 0)))
    grid = (Bp // TB,)

    row_spec = pl.BlockSpec((TB, PAD_DIM), lambda i: (i, 0))
    const_specs = [pl.BlockSpec(p_.shape, lambda i: (0, 0)) for p_ in kernel_params]

    flops_per_row = 2 * (PAD_DIM * 64 + 64 * 32 + 32 * 16 + 16 * 8
                         + 2 * 32 + 32 * 64 + 64 * PAD_DIM)
    param_bytes = sum(int(p_.size) * 4 for p_ in kernel_params)
    cost = pl.CostEstimate(
        flops=flops_per_row * Bp,
        transcendentals=(2 + PAD_DIM) * Bp,
        bytes_accessed=Bp * PAD_DIM * (2 + 4) + param_bytes,
    )

    out = pl.pallas_call(
        _vae_kernel,
        grid=grid,
        in_specs=[row_spec] + const_specs,
        out_specs=row_spec,
        out_shape=jax.ShapeDtypeStruct((Bp, PAD_DIM), jnp.float32),
        compiler_params=pltpu.CompilerParams(dimension_semantics=("parallel",)),
        cost_estimate=cost,
    )(xn, *kernel_params)

    out = out[:B]
    p = out[:, :IN_DIM]
    mus = out[:, STATS_OFF:STATS_OFF + 2]
    diag_logvars = out[:, STATS_OFF + 2:STATS_OFF + 4]
    L = out[:, STATS_OFF + 4:STATS_OFF + 8].reshape(B, 2, 2)
    z = out[:, STATS_OFF + 8:STATS_OFF + 10]
    return mus, diag_logvars, L, noise_used, z, p


def init_params(key):
    """Deterministic parameter init with the same shapes as the PyTorch module."""
    dims = [
        (100, 64), (64, 32), (32, 16), (16, 8),   # encoder
        (2, 32), (32, 64), (64, 100),             # decoder (fc1_up, fc2_up, fc3_up)
    ]
    params = []
    for (d_in, d_out) in dims:
        key, kw, kb = jax.random.split(key, 3)
        bound = 1.0 / jnp.sqrt(jnp.float32(d_in))
        w = jax.random.uniform(kw, (d_in, d_out), jnp.float32, -bound, bound)
        b = jax.random.uniform(kb, (1, d_out), jnp.float32, -bound, bound)
        params += [w, b]
    return tuple(params)


def _vae_reference(x, noise, params):
    """Pure-JAX reference of the same forward (for numerical checks)."""
    ew1, eb1, ew2, eb2, ew3, eb3, ew4, eb4, dw1, db1, dw2, db2, dw3, db3 = params
    h = jax.nn.relu(x @ ew1 + eb1)
    h = jax.nn.relu(h @ ew2 + eb2)
    h = jax.nn.relu(h @ ew3 + eb3)
    enc = h @ ew4 + eb4
    mus, lv = enc[:, 0:2], enc[:, 2:4]
    e = jnp.exp(0.5 * lv)
    l10 = enc[:, 6:7]
    L = jnp.stack([jnp.concatenate([e[:, 0:1], jnp.zeros_like(l10)], -1),
                   jnp.concatenate([l10, e[:, 1:2]], -1)], axis=1)
    z = mus + jnp.einsum("bij,bj->bi", L, noise)
    y = jax.nn.relu(z @ dw1 + db1)
    y = jax.nn.relu(y @ dw2 + db2)
    p = jax.nn.sigmoid(y @ dw3 + db3)
    return mus, lv, L, z, p


def _check(x, noise, params, outs, atol=1e-3, rtol=1e-3):
    mus, diag_logvars, L, noise_out, z, p = outs
    B = x.shape[0]
    assert mus.shape == (B, 2)
    assert diag_logvars.shape == (B, 2)
    assert L.shape == (B, 2, 2)
    assert noise_out.shape == (B, 2)
    assert z.shape == (B, 2)
    assert p.shape == (B, 100)
    # Reference computed with the (bf16-rounded) noise the kernel actually used.
    r_mus, r_lv, r_L, r_z, r_p = _vae_reference(x, noise_out, params)
    assert jnp.allclose(mus, r_mus, atol=atol, rtol=rtol)
    assert jnp.allclose(diag_logvars, r_lv, atol=atol, rtol=rtol)
    assert jnp.allclose(L, r_L, atol=atol, rtol=rtol)
    assert jnp.allclose(z, r_z, atol=atol, rtol=rtol)
    assert jnp.allclose(p, r_p, atol=atol, rtol=rtol)
    assert bool(jnp.all(jnp.isfinite(p)))


if __name__ == "__main__":
    key = jax.random.PRNGKey(0)
    k_params, k_x, k_noise, k_x2, k_noise2 = jax.random.split(key, 5)

    params = init_params(k_params)

    # Small demo batch: default tb -> 2 grid steps (both v7x TensorCores busy).
    B = 64
    x = (jax.random.uniform(k_x, (B, 100), jnp.float32) > 0.5).astype(jnp.float32)
    noise = jax.random.normal(k_noise, (B, 2), jnp.float32)
    outs = vae_forward(x, noise, params)
    jax.block_until_ready(outs)
    _check(x, noise, params, outs)

    # Non-multiple-of-8 batch with explicit small tile: exercises batch padding + 4 steps.
    B2 = 200
    x2 = (jax.random.uniform(k_x2, (B2, 100), jnp.float32) > 0.5).astype(jnp.float32)
    noise2 = jax.random.normal(k_noise2, (B2, 2), jnp.float32)
    outs2 = vae_forward(x2, noise2, params, tb=64)
    jax.block_until_ready(outs2)
    _check(x2, noise2, params, outs2)

    print("KERNEL_OK")
</pallas_src>

<mosaic_0001>
module attributes {stable_mosaic.version = 11 : i64} {
  func.func @_vae_kernel(%arg0: i32, %arg1: memref<32x128xbf16, #tpu.memory_space<vmem>>, %arg2: memref<128x64xf32, #tpu.memory_space<vmem>>, %arg3: memref<1x64xf32, #tpu.memory_space<vmem>>, %arg4: memref<64x32xf32, #tpu.memory_space<vmem>>, %arg5: memref<1x32xf32, #tpu.memory_space<vmem>>, %arg6: memref<32x16xf32, #tpu.memory_space<vmem>>, %arg7: memref<1x16xf32, #tpu.memory_space<vmem>>, %arg8: memref<16x8xf32, #tpu.memory_space<vmem>>, %arg9: memref<1x8xf32, #tpu.memory_space<vmem>>, %arg10: memref<2x32xf32, #tpu.memory_space<vmem>>, %arg11: memref<1x32xf32, #tpu.memory_space<vmem>>, %arg12: memref<32x64xf32, #tpu.memory_space<vmem>>, %arg13: memref<1x64xf32, #tpu.memory_space<vmem>>, %arg14: memref<64x128xf32, #tpu.memory_space<vmem>>, %arg15: memref<1x128xf32, #tpu.memory_space<vmem>>, %arg16: memref<32x128xf32, #tpu.memory_space<vmem>>) attributes {dimension_semantics = [#tpu.dimension_semantics<parallel>], iteration_bounds = array<i64: 2>, scalar_prefetch = 0 : i64, scratch_operands = 0 : i64, tpu.core_type = #tpu.core_type<tc>, window_params = [{transform_indices = @transform_0, window_bounds = array<i64: 32, 128>}, {pipeline_mode = #tpu.pipeline_mode<synchronous>, transform_indices = @transform_1, window_bounds = array<i64: 128, 64>}, {pipeline_mode = #tpu.pipeline_mode<synchronous>, transform_indices = @transform_2, window_bounds = array<i64: 1, 64>}, {pipeline_mode = #tpu.pipeline_mode<synchronous>, transform_indices = @transform_3, window_bounds = array<i64: 64, 32>}, {pipeline_mode = #tpu.pipeline_mode<synchronous>, transform_indices = @transform_4, window_bounds = array<i64: 1, 32>}, {pipeline_mode = #tpu.pipeline_mode<synchronous>, transform_indices = @transform_5, window_bounds = array<i64: 32, 16>}, {pipeline_mode = #tpu.pipeline_mode<synchronous>, transform_indices = @transform_6, window_bounds = array<i64: 1, 16>}, {pipeline_mode = #tpu.pipeline_mode<synchronous>, transform_indices = @transform_7, window_bounds = array<i64: 16, 8>}, {pipeline_mode = #tpu.pipeline_mode<synchronous>, transform_indices = @transform_8, window_bounds = array<i64: 1, 8>}, {pipeline_mode = #tpu.pipeline_mode<synchronous>, transform_indices = @transform_9, window_bounds = array<i64: 2, 32>}, {pipeline_mode = #tpu.pipeline_mode<synchronous>, transform_indices = @transform_10, window_bounds = array<i64: 1, 32>}, {pipeline_mode = #tpu.pipeline_mode<synchronous>, transform_indices = @transform_11, window_bounds = array<i64: 32, 64>}, {pipeline_mode = #tpu.pipeline_mode<synchronous>, transform_indices = @transform_12, window_bounds = array<i64: 1, 64>}, {pipeline_mode = #tpu.pipeline_mode<synchronous>, transform_indices = @transform_13, window_bounds = array<i64: 64, 128>}, {pipeline_mode = #tpu.pipeline_mode<synchronous>, transform_indices = @transform_14, window_bounds = array<i64: 1, 128>}, {transform_indices = @transform_15, window_bounds = array<i64: 32, 128>}]} {
    %c0 = arith.constant 0 : index
    %c0_0 = arith.constant 0 : index
    %0 = vector.load %arg1[%c0, %c0_0] : memref<32x128xbf16, #tpu.memory_space<vmem>>, vector<32x128xbf16>
    %1 = arith.extf %0 : vector<32x128xbf16> to vector<32x128xf32>
    %c0_1 = arith.constant 0 : index
    %c0_2 = arith.constant 0 : index
    %2 = vector.load %arg2[%c0_1, %c0_2] : memref<128x64xf32, #tpu.memory_space<vmem>>, vector<128x64xf32>
    %cst = arith.constant dense<0.000000e+00> : vector<32x64xf32>
    %3 = tpu.matmul %1, %2, %cst {dimension_numbers = #tpu.dot_dimension_numbers<[1], [0], [0], [1], [0, 0, 1, 1], [], []>} : vector<32x128xf32>, vector<128x64xf32>, vector<32x64xf32> -> vector<32x64xf32>
    %c0_3 = arith.constant 0 : index
    %c0_4 = arith.constant 0 : index
    %4 = vector.load %arg3[%c0_3, %c0_4] : memref<1x64xf32, #tpu.memory_space<vmem>>, vector<1x64xf32>
    %5 = vector.broadcast %4 : vector<1x64xf32> to vector<32x64xf32>
    %6 = arith.addf %3, %5 : vector<32x64xf32>
    %cst_5 = arith.constant 0.000000e+00 : f32
    %7 = vector.broadcast %cst_5 : f32 to vector<32x64xf32>
    %8 = arith.maximumf %6, %7 : vector<32x64xf32>
    %c0_6 = arith.constant 0 : index
    %c0_7 = arith.constant 0 : index
    %9 = vector.load %arg4[%c0_6, %c0_7] : memref<64x32xf32, #tpu.memory_space<vmem>>, vector<64x32xf32>
    %cst_8 = arith.constant dense<0.000000e+00> : vector<32x32xf32>
    %10 = tpu.matmul %8, %9, %cst_8 {dimension_numbers = #tpu.dot_dimension_numbers<[1], [0], [0], [1], [0, 0, 1, 1], [], []>} : vector<32x64xf32>, vector<64x32xf32>, vector<32x32xf32> -> vector<32x32xf32>
    %c0_9 = arith.constant 0 : index
    %c0_10 = arith.constant 0 : index
    %11 = vector.load %arg5[%c0_9, %c0_10] : memref<1x32xf32, #tpu.memory_space<vmem>>, vector<1x32xf32>
    %12 = vector.broadcast %11 : vector<1x32xf32> to vector<32x32xf32>
    %13 = arith.addf %10, %12 : vector<32x32xf32>
    %cst_11 = arith.constant 0.000000e+00 : f32
    %14 = vector.broadcast %cst_11 : f32 to vector<32x32xf32>
    %15 = arith.maximumf %13, %14 : vector<32x32xf32>
    %c0_12 = arith.constant 0 : index
    %c0_13 = arith.constant 0 : index
    %16 = vector.load %arg6[%c0_12, %c0_13] : memref<32x16xf32, #tpu.memory_space<vmem>>, vector<32x16xf32>
    %cst_14 = arith.constant dense<0.000000e+00> : vector<32x16xf32>
    %17 = tpu.matmul %15, %16, %cst_14 {dimension_numbers = #tpu.dot_dimension_numbers<[1], [0], [0], [1], [0, 0, 1, 1], [], []>} : vector<32x32xf32>, vector<32x16xf32>, vector<32x16xf32> -> vector<32x16xf32>
    %c0_15 = arith.constant 0 : index
    %c0_16 = arith.constant 0 : index
    %18 = vector.load %arg7[%c0_15, %c0_16] : memref<1x16xf32, #tpu.memory_space<vmem>>, vector<1x16xf32>
    %19 = vector.broadcast %18 : vector<1x16xf32> to vector<32x16xf32>
    %20 = arith.addf %17, %19 : vector<32x16xf32>
    %cst_17 = arith.constant 0.000000e+00 : f32
    %21 = vector.broadcast %cst_17 : f32 to vector<32x16xf32>
    %22 = arith.maximumf %20, %21 : vector<32x16xf32>
    %c0_18 = arith.constant 0 : index
    %c0_19 = arith.constant 0 : index
    %23 = vector.load %arg8[%c0_18, %c0_19] : memref<16x8xf32, #tpu.memory_space<vmem>>, vector<16x8xf32>
    %cst_20 = arith.constant dense<0.000000e+00> : vector<32x8xf32>
    %24 = tpu.matmul %22, %23, %cst_20 {dimension_numbers = #tpu.dot_dimension_numbers<[1], [0], [0], [1], [0, 0, 1, 1], [], []>} : vector<32x16xf32>, vector<16x8xf32>, vector<32x8xf32> -> vector<32x8xf32>
    %c0_21 = arith.constant 0 : index
    %c0_22 = arith.constant 0 : index
    %25 = vector.load %arg9[%c0_21, %c0_22] : memref<1x8xf32, #tpu.memory_space<vmem>>, vector<1x8xf32>
    %26 = vector.broadcast %25 : vector<1x8xf32> to vector<32x8xf32>
    %27 = arith.addf %24, %26 : vector<32x8xf32>
    %28 = vector.extract_strided_slice %27 {offsets = [0, 0], sizes = [32, 2], strides = [1, 1]} : vector<32x8xf32> to vector<32x2xf32>
    %29 = vector.extract_strided_slice %27 {offsets = [0, 2], sizes = [32, 2], strides = [1, 1]} : vector<32x8xf32> to vector<32x2xf32>
    %cst_23 = arith.constant 5.000000e-01 : f32
    %30 = vector.broadcast %cst_23 : f32 to vector<32x2xf32>
    %31 = arith.mulf %30, %29 : vector<32x2xf32>
    %32 = math.exp %31 : vector<32x2xf32>
    %33 = vector.extract_strided_slice %32 {offsets = [0, 0], sizes = [32, 1], strides = [1, 1]} : vector<32x2xf32> to vector<32x1xf32>
    %34 = vector.extract_strided_slice %32 {offsets = [0, 1], sizes = [32, 1], strides = [1, 1]} : vector<32x2xf32> to vector<32x1xf32>
    %35 = vector.extract_strided_slice %27 {offsets = [0, 6], sizes = [32, 1], strides = [1, 1]} : vector<32x8xf32> to vector<32x1xf32>
    %36 = vector.extract_strided_slice %1 {offsets = [0, 100], sizes = [32, 1], strides = [1, 1]} : vector<32x128xf32> to vector<32x1xf32>
    %37 = vector.extract_strided_slice %1 {offsets = [0, 101], sizes = [32, 1], strides = [1, 1]} : vector<32x128xf32> to vector<32x1xf32>
    %38 = vector.extract_strided_slice %28 {offsets = [0, 0], sizes = [32, 1], strides = [1, 1]} : vector<32x2xf32> to vector<32x1xf32>
    %39 = arith.mulf %33, %36 : vector<32x1xf32>
    %40 = arith.addf %38, %39 : vector<32x1xf32>
    %41 = vector.extract_strided_slice %28 {offsets = [0, 1], sizes = [32, 1], strides = [1, 1]} : vector<32x2xf32> to vector<32x1xf32>
    %42 = arith.mulf %35, %36 : vector<32x1xf32>
    %43 = arith.addf %41, %42 : vector<32x1xf32>
    %44 = arith.mulf %34, %37 : vector<32x1xf32>
    %45 = arith.addf %43, %44 : vector<32x1xf32>
    %c0_24 = arith.constant 0 : index
    %c0_25 = arith.constant 0 : index
    %46 = vector.load %arg10[%c0_24, %c0_25] : memref<2x32xf32, #tpu.memory_space<vmem>>, vector<2x32xf32>
    %47 = vector.extract_strided_slice %46 {offsets = [0, 0], sizes = [1, 32], strides = [1, 1]} : vector<2x32xf32> to vector<1x32xf32>
    %48 = vector.broadcast %40 : vector<32x1xf32> to vector<32x32xf32>
    %49 = vector.broadcast %47 : vector<1x32xf32> to vector<32x32xf32>
    %50 = arith.mulf %48, %49 : vector<32x32xf32>
    %51 = vector.extract_strided_slice %46 {offsets = [1, 0], sizes = [1, 32], strides = [1, 1]} : vector<2x32xf32> to vector<1x32xf32>
    %52 = vector.broadcast %45 : vector<32x1xf32> to vector<32x32xf32>
    %53 = vector.broadcast %51 : vector<1x32xf32> to vector<32x32xf32>
    %54 = arith.mulf %52, %53 : vector<32x32xf32>
    %55 = arith.addf %50, %54 : vector<32x32xf32>
    %c0_26 = arith.constant 0 : index
    %c0_27 = arith.constant 0 : index
    %56 = vector.load %arg11[%c0_26, %c0_27] : memref<1x32xf32, #tpu.memory_space<vmem>>, vector<1x32xf32>
    %57 = vector.broadcast %56 : vector<1x32xf32> to vector<32x32xf32>
    %58 = arith.addf %55, %57 : vector<32x32xf32>
    %cst_28 = arith.constant 0.000000e+00 : f32
    %59 = vector.broadcast %cst_28 : f32 to vector<32x32xf32>
    %60 = arith.maximumf %58, %59 : vector<32x32xf32>
    %c0_29 = arith.constant 0 : index
    %c0_30 = arith.constant 0 : index
    %61 = vector.load %arg12[%c0_29, %c0_30] : memref<32x64xf32, #tpu.memory_space<vmem>>, vector<32x64xf32>
    %cst_31 = arith.constant dense<0.000000e+00> : vector<32x64xf32>
    %62 = tpu.matmul %60, %61, %cst_31 {dimension_numbers = #tpu.dot_dimension_numbers<[1], [0], [0], [1], [0, 0, 1, 1], [], []>} : vector<32x32xf32>, vector<32x64xf32>, vector<32x64xf32> -> vector<32x64xf32>
    %c0_32 = arith.constant 0 : index
    %c0_33 = arith.constant 0 : index
    %63 = vector.load %arg13[%c0_32, %c0_33] : memref<1x64xf32, #tpu.memory_space<vmem>>, vector<1x64xf32>
    %64 = vector.broadcast %63 : vector<1x64xf32> to vector<32x64xf32>
    %65 = arith.addf %62, %64 : vector<32x64xf32>
    %cst_34 = arith.constant 0.000000e+00 : f32
    %66 = vector.broadcast %cst_34 : f32 to vector<32x64xf32>
    %67 = arith.maximumf %65, %66 : vector<32x64xf32>
    %c0_35 = arith.constant 0 : index
    %c0_36 = arith.constant 0 : index
    %68 = vector.load %arg14[%c0_35, %c0_36] : memref<64x128xf32, #tpu.memory_space<vmem>>, vector<64x128xf32>
    %cst_37 = arith.constant dense<0.000000e+00> : vector<32x128xf32>
    %69 = tpu.matmul %67, %68, %cst_37 {dimension_numbers = #tpu.dot_dimension_numbers<[1], [0], [0], [1], [0, 0, 1, 1], [], []>} : vector<32x64xf32>, vector<64x128xf32>, vector<32x128xf32> -> vector<32x128xf32>
    %c0_38 = arith.constant 0 : index
    %c0_39 = arith.constant 0 : index
    %70 = vector.load %arg15[%c0_38, %c0_39] : memref<1x128xf32, #tpu.memory_space<vmem>>, vector<1x128xf32>
    %71 = vector.broadcast %70 : vector<1x128xf32> to vector<32x128xf32>
    %72 = arith.addf %69, %71 : vector<32x128xf32>
    %cst_40 = arith.constant 0.000000e+00 : f32
    %73 = vector.broadcast %cst_40 : f32 to vector<32x128xf32>
    %74 = arith.subf %73, %72 : vector<32x128xf32>
    %75 = math.exp %74 : vector<32x128xf32>
    %cst_41 = arith.constant 1.000000e+00 : f32
    %76 = vector.broadcast %cst_41 : f32 to vector<32x128xf32>
    %77 = arith.addf %76, %75 : vector<32x128xf32>
    %cst_42 = arith.constant 1.000000e+00 : f32
    %78 = vector.broadcast %cst_42 : f32 to vector<32x128xf32>
    %79 = arith.divf %78, %77 : vector<32x128xf32>
    %cst_43 = arith.constant 0.000000e+00 : f32
    %80 = vector.broadcast %cst_43 : f32 to vector<32x1xf32>
    %81 = tpu.concatenate %28, %29, %33, %80, %35, %34, %40, %45 in 1 : vector<32x2xf32>, vector<32x2xf32>, vector<32x1xf32>, vector<32x1xf32>, vector<32x1xf32>, vector<32x1xf32>, vector<32x1xf32>, vector<32x1xf32> -> vector<32x10xf32>
    %82 = vector.extract_strided_slice %79 {offsets = [0, 0], sizes = [32, 100], strides = [1, 1]} : vector<32x128xf32> to vector<32x100xf32>
    %83 = vector.extract_strided_slice %79 {offsets = [0, 110], sizes = [32, 18], strides = [1, 1]} : vector<32x128xf32> to vector<32x18xf32>
    %84 = tpu.concatenate %82, %81, %83 in 1 : vector<32x100xf32>, vector<32x10xf32>, vector<32x18xf32> -> vector<32x128xf32>
    %c0_44 = arith.constant 0 : index
    %c0_45 = arith.constant 0 : index
    %85 = vector.load %arg16[%c0_44, %c0_45] : memref<32x128xf32, #tpu.memory_space<vmem>>, vector<32x128xf32>
    tpu.vector_store %arg16[%c0_44, %c0_45], %84 {strides = array<i32>} : memref<32x128xf32, #tpu.memory_space<vmem>>, vector<32x128xf32>,
    return
  }
  func.func @transform_0(%arg0: i32) -> (i32, i32) {
    %c0_i32 = arith.constant 0 : i32
    %c0_i32_0 = arith.constant 0 : i32
    return %arg0, %c0_i32 : i32, i32
  }
  func.func @transform_1(%arg0: i32) -> (i32, i32) {
    %c0_i32 = arith.constant 0 : i32
    %c0_i32_0 = arith.constant 0 : i32
    %c0_i32_1 = arith.constant 0 : i32
    return %c0_i32, %c0_i32_0 : i32, i32
  }
  func.func @transform_2(%arg0: i32) -> (i32, i32) {
    %c0_i32 = arith.constant 0 : i32
    %c0_i32_0 = arith.constant 0 : i32
    %c0_i32_1 = arith.constant 0 : i32
    return %c0_i32, %c0_i32_0 : i32, i32
  }
  func.func @transform_3(%arg0: i32) -> (i32, i32) {
    %c0_i32 = arith.constant 0 : i32
    %c0_i32_0 = arith.constant 0 : i32
    %c0_i32_1 = arith.constant 0 : i32
    return %c0_i32, %c0_i32_0 : i32, i32
  }
  func.func @transform_4(%arg0: i32) -> (i32, i32) {
    %c0_i32 = arith.constant 0 : i32
    %c0_i32_0 = arith.constant 0 : i32
    %c0_i32_1 = arith.constant 0 : i32
    return %c0_i32, %c0_i32_0 : i32, i32
  }
  func.func @transform_5(%arg0: i32) -> (i32, i32) {
    %c0_i32 = arith.constant 0 : i32
    %c0_i32_0 = arith.constant 0 : i32
    %c0_i32_1 = arith.constant 0 : i32
    return %c0_i32, %c0_i32_0 : i32, i32
  }
  func.func @transform_6(%arg0: i32) -> (i32, i32) {
    %c0_i32 = arith.constant 0 : i32
    %c0_i32_0 = arith.constant 0 : i32
    %c0_i32_1 = arith.constant 0 : i32
    return %c0_i32, %c0_i32_0 : i32, i32
  }
  func.func @transform_7(%arg0: i32) -> (i32, i32) {
    %c0_i32 = arith.constant 0 : i32
    %c0_i32_0 = arith.constant 0 : i32
    %c0_i32_1 = arith.constant 0 : i32
    return %c0_i32, %c0_i32_0 : i32, i32
  }
  func.func @transform_8(%arg0: i32) -> (i32, i32) {
    %c0_i32 = arith.constant 0 : i32
    %c0_i32_0 = arith.constant 0 : i32
    %c0_i32_1 = arith.constant 0 : i32
    return %c0_i32, %c0_i32_0 : i32, i32
  }
  func.func @transform_9(%arg0: i32) -> (i32, i32) {
    %c0_i32 = arith.constant 0 : i32
    %c0_i32_0 = arith.constant 0 : i32
    %c0_i32_1 = arith.constant 0 : i32
    return %c0_i32, %c0_i32_0 : i32, i32
  }
  func.func @transform_10(%arg0: i32) -> (i32, i32) {
    %c0_i32 = arith.constant 0 : i32
    %c0_i32_0 = arith.constant 0 : i32
    %c0_i32_1 = arith.constant 0 : i32
    return %c0_i32, %c0_i32_0 : i32, i32
  }
  func.func @transform_11(%arg0: i32) -> (i32, i32) {
    %c0_i32 = arith.constant 0 : i32
    %c0_i32_0 = arith.constant 0 : i32
    %c0_i32_1 = arith.constant 0 : i32
    return %c0_i32, %c0_i32_0 : i32, i32
  }
  func.func @transform_12(%arg0: i32) -> (i32, i32) {
    %c0_i32 = arith.constant 0 : i32
    %c0_i32_0 = arith.constant 0 : i32
    %c0_i32_1 = arith.constant 0 : i32
    return %c0_i32, %c0_i32_0 : i32, i32
  }
  func.func @transform_13(%arg0: i32) -> (i32, i32) {
    %c0_i32 = arith.constant 0 : i32
    %c0_i32_0 = arith.constant 0 : i32
    %c0_i32_1 = arith.constant 0 : i32
    return %c0_i32, %c0_i32_0 : i32, i32
  }
  func.func @transform_14(%arg0: i32) -> (i32, i32) {
    %c0_i32 = arith.constant 0 : i32
    %c0_i32_0 = arith.constant 0 : i32
    %c0_i32_1 = arith.constant 0 : i32
    return %c0_i32, %c0_i32_0 : i32, i32
  }
  func.func @transform_15(%arg0: i32) -> (i32, i32) {
    %c0_i32 = arith.constant 0 : i32
    %c0_i32_0 = arith.constant 0 : i32
    return %arg0, %c0_i32 : i32, i32
  }
}

</mosaic_0001>

<llo_original>
// kernel: vae_forward.1
$region0: #{vae_forward.1}
  #allocation0 [shape = 'u32[]', space=smem, size = 0x4, offset = 0x4, fixed_abs, tag = 'smem constant byte address 0x4 - core index']
  #allocation1 [shape = 'u32[144,128]{1,0:T(1,128)}', space=vmem, size = 0x12000, scoped, tag = 'internal scratch']
  %s0 = inlined_call_operand.vmem [shape: bf16[64,128], index: 0, kind: input, shape index: {}]
  %s1 = inlined_call_operand.vmem [shape: f32[128,64], index: 1, kind: input, shape index: {}]
  %s2 = inlined_call_operand.vmem [shape: f32[1,64], index: 2, kind: input, shape index: {}]
  %s3 = inlined_call_operand.vmem [shape: f32[64,32], index: 3, kind: input, shape index: {}]
  %s4 = inlined_call_operand.vmem [shape: f32[1,32], index: 4, kind: input, shape index: {}]
  %s5 = inlined_call_operand.vmem [shape: f32[32,16], index: 5, kind: input, shape index: {}]
  %s6 = inlined_call_operand.vmem [shape: f32[1,16], index: 6, kind: input, shape index: {}]
  %s7 = inlined_call_operand.vmem [shape: f32[16,8], index: 7, kind: input, shape index: {}]
  %s8 = inlined_call_operand.vmem [shape: f32[1,8], index: 8, kind: input, shape index: {}]
  %s9 = inlined_call_operand.vmem [shape: f32[2,32], index: 9, kind: input, shape index: {}]
  %s10 = inlined_call_operand.vmem [shape: f32[1,32], index: 10, kind: input, shape index: {}]
  %s11 = inlined_call_operand.vmem [shape: f32[32,64], index: 11, kind: input, shape index: {}]
  %s12 = inlined_call_operand.vmem [shape: f32[1,64], index: 12, kind: input, shape index: {}]
  %s13 = inlined_call_operand.vmem [shape: f32[64,128], index: 13, kind: input, shape index: {}]
  %s14 = inlined_call_operand.vmem [shape: f32[1,128], index: 14, kind: input, shape index: {}]
  %s15 = inlined_call_operand.vmem [shape: f32[64,128], index: 15, kind: output, shape index: {}]
  %s16 = sld [smem:[#allocation0]]
  $region93: #{vae_forward.1} parent=0
    _
  %s18 = ssub.s32 1, %s16
  %s19 = scalar_select 0, %s18, %s16
  loop: start=0, step=1, limit=4
  $region2: #{vae_forward.1} parent=0 // loop_pre_header
    _
  $region3: #{vae_forward.1} parent=0 // loop_header
    %s21 = sphi 0, %s25
    %p22 = scmp.ge.s32.totalorder %s21, 4
    %s31 = sphi 0, %s33
    %s34 = sphi 0, %s31
    %s35 = sphi 0, %s34
    %s51 = sphi 0, %s35
    %s55 = sphi 0, %s55
    %s57 = sphi 0, %s55
    %s58 = sphi 0, %s57
    %s72 = sphi 0, %s58
    %s76 = sphi 0, %s76
    %s78 = sphi 0, %s76
    %s79 = sphi 0, %s78
    %s93 = sphi 0, %s79
    %s97 = sphi 0, %s97
    %s99 = sphi 0, %s97
    %s100 = sphi 0, %s99
    %s114 = sphi 0, %s100
    %s118 = sphi 0, %s118
    %s120 = sphi 0, %s118
    %s121 = sphi 0, %s120
    %s135 = sphi 0, %s121
    %s139 = sphi 0, %s139
    %s141 = sphi 0, %s139
    %s142 = sphi 0, %s141
    %s156 = sphi 0, %s142
    %s160 = sphi 0, %s160
    %s162 = sphi 0, %s160
    %s163 = sphi 0, %s162
    %s177 = sphi 0, %s163
    %s181 = sphi 0, %s181
    %s183 = sphi 0, %s181
    %s184 = sphi 0, %s183
    %s198 = sphi 0, %s184
    %s202 = sphi 0, %s202
    %s204 = sphi 0, %s202
    %s205 = sphi 0, %s204
    %s219 = sphi 0, %s205
    %s223 = sphi 0, %s223
    %s225 = sphi 0, %s223
    %s226 = sphi 0, %s225
    %s240 = sphi 0, %s226
    %s244 = sphi 0, %s244
    %s246 = sphi 0, %s244
    %s247 = sphi 0, %s246
    %s261 = sphi 0, %s247
    %s265 = sphi 0, %s265
    %s267 = sphi 0, %s265
    %s268 = sphi 0, %s267
    %s282 = sphi 0, %s268
    %s286 = sphi 0, %s286
    %s288 = sphi 0, %s286
    %s289 = sphi 0, %s288
    %s303 = sphi 0, %s289
    %s307 = sphi 0, %s307
    %s309 = sphi 0, %s307
    %s310 = sphi 0, %s309
    %s324 = sphi 0, %s310
    %s328 = sphi 0, %s328
    %s330 = sphi 0, %s328
    %s331 = sphi 0, %s330
    %s345 = sphi 0, %s331
    %s351 = sphi 0, %s353
    %s354 = sphi 0, %s351
    %s355 = sphi 0, %s354
    %s371 = sphi 0, %s355
  $region4: #{vae_forward.1} parent=0 // loop_header_branch
    %24 = sbr.rel (%p22) target = $region8
  $region5: #{vae_forward.1} parent=0 // loop_body
    %s26 = ssub.s32 %s21, 1
    %s27 = ssub.s32 %s21, 2
    %s28 = sadd.s32 %s21, 1
    %s29 = ssub.s32 %s21, %s28
    %p30 = scmp.eq.s32.totalorder %s29, 0
    %s32 = sadd.s32 %s31, 1
    %s33 = scalar_select %p30, %s31, %s32
    %p36 = pneg %p30
    %p37 = scmp.eq.s32.totalorder %s21, 1
    %p38 = por %p36, %p37
    %p39 = scmp.ne.s32.totalorder %s31, %s34
    %p40 = scmp.eq.s32.totalorder %s21, 0
    %p41 = por %p39, %p40
    %p42 = scmp.ne.s32.totalorder %s31, %s34
    %p43 = scmp.eq.s32.totalorder %s26, 1
    %p44 = por %p42, %p43
    %p45 = scmp.ne.s32.totalorder %s34, %s35
    %p46 = scmp.eq.s32.totalorder %s26, 0
    %p47 = por %p45, %p46
    %p48 = scmp.ne.s32.totalorder %s34, %s35
    %p49 = scmp.eq.s32.totalorder %s27, 1
    %p50 = por %p48, %p49
    %p52 = scmp.ne.s32.totalorder %s35, %s51
    %p53 = scmp.eq.s32.totalorder %s27, 0
    %p54 = por %p52, %p53
    %s56 = sadd.s32 %s55, 1
    %p59 = scmp.eq.s32.totalorder %s21, 1
    %p60 = scmp.ne.s32.totalorder %s55, %s57
    %p61 = scmp.eq.s32.totalorder %s21, 0
    %p62 = por %p60, %p61
    %p63 = scmp.ne.s32.totalorder %s55, %s57
    %p64 = scmp.eq.s32.totalorder %s26, 1
    %p65 = por %p63, %p64
    %p66 = scmp.ne.s32.totalorder %s57, %s58
    %p67 = scmp.eq.s32.totalorder %s26, 0
    %p68 = por %p66, %p67
    %p69 = scmp.ne.s32.totalorder %s57, %s58
    %p70 = scmp.eq.s32.totalorder %s27, 1
    %p71 = por %p69, %p70
    %p73 = scmp.ne.s32.totalorder %s58, %s72
    %p74 = scmp.eq.s32.totalorder %s27, 0
    %p75 = por %p73, %p74
    %s77 = sadd.s32 %s76, 1
    %p80 = scmp.eq.s32.totalorder %s21, 1
    %p81 = scmp.ne.s32.totalorder %s76, %s78
    %p82 = scmp.eq.s32.totalorder %s21, 0
    %p83 = por %p81, %p82
    %p84 = scmp.ne.s32.totalorder %s76, %s78
    %p85 = scmp.eq.s32.totalorder %s26, 1
    %p86 = por %p84, %p85
    %p87 = scmp.ne.s32.totalorder %s78, %s79
    %p88 = scmp.eq.s32.totalorder %s26, 0
    %p89 = por %p87, %p88
    %p90 = scmp.ne.s32.totalorder %s78, %s79
    %p91 = scmp.eq.s32.totalorder %s27, 1
    %p92 = por %p90, %p91
    %p94 = scmp.ne.s32.totalorder %s79, %s93
    %p95 = scmp.eq.s32.totalorder %s27, 0
    %p96 = por %p94, %p95
    %s98 = sadd.s32 %s97, 1
    %p101 = scmp.eq.s32.totalorder %s21, 1
    %p102 = scmp.ne.s32.totalorder %s97, %s99
    %p103 = scmp.eq.s32.totalorder %s21, 0
    %p104 = por %p102, %p103
    %p105 = scmp.ne.s32.totalorder %s97, %s99
    %p106 = scmp.eq.s32.totalorder %s26, 1
    %p107 = por %p105, %p106
    %p108 = scmp.ne.s32.totalorder %s99, %s100
    %p109 = scmp.eq.s32.totalorder %s26, 0
    %p110 = por %p108, %p109
    %p111 = scmp.ne.s32.totalorder %s99, %s100
    %p112 = scmp.eq.s32.totalorder %s27, 1
    %p113 = por %p111, %p112
    %p115 = scmp.ne.s32.totalorder %s100, %s114
    %p116 = scmp.eq.s32.totalorder %s27, 0
    %p117 = por %p115, %p116
    %s119 = sadd.s32 %s118, 1
    %p122 = scmp.eq.s32.totalorder %s21, 1
    %p123 = scmp.ne.s32.totalorder %s118, %s120
    %p124 = scmp.eq.s32.totalorder %s21, 0
    %p125 = por %p123, %p124
    %p126 = scmp.ne.s32.totalorder %s118, %s120
    %p127 = scmp.eq.s32.totalorder %s26, 1
    %p128 = por %p126, %p127
    %p129 = scmp.ne.s32.totalorder %s120, %s121
    %p130 = scmp.eq.s32.totalorder %s26, 0
    %p131 = por %p129, %p130
    %p132 = scmp.ne.s32.totalorder %s120, %s121
    %p133 = scmp.eq.s32.totalorder %s27, 1
    %p134 = por %p132, %p133
    %p136 = scmp.ne.s32.totalorder %s121, %s135
    %p137 = scmp.eq.s32.totalorder %s27, 0
    %p138 = por %p136, %p137
    %s140 = sadd.s32 %s139, 1
    %p143 = scmp.eq.s32.totalorder %s21, 1
    %p144 = scmp.ne.s32.totalorder %s139, %s141
    %p145 = scmp.eq.s32.totalorder %s21, 0
    %p146 = por %p144, %p145
    %p147 = scmp.ne.s32.totalorder %s139, %s141
    %p148 = scmp.eq.s32.totalorder %s26, 1
    %p149 = por %p147, %p148
    %p150 = scmp.ne.s32.totalorder %s141, %s142
    %p151 = scmp.eq.s32.totalorder %s26, 0
    %p152 = por %p150, %p151
    %p153 = scmp.ne.s32.totalorder %s141, %s142
    %p154 = scmp.eq.s32.totalorder %s27, 1
    %p155 = por %p153, %p154
    %p157 = scmp.ne.s32.totalorder %s142, %s156
    %p158 = scmp.eq.s32.totalorder %s27, 0
    %p159 = por %p157, %p158
    %s161 = sadd.s32 %s160, 1
    %p164 = scmp.eq.s32.totalorder %s21, 1
    %p165 = scmp.ne.s32.totalorder %s160, %s162
    %p166 = scmp.eq.s32.totalorder %s21, 0
    %p167 = por %p165, %p166
    %p168 = scmp.ne.s32.totalorder %s160, %s162
    %p169 = scmp.eq.s32.totalorder %s26, 1
    %p170 = por %p168, %p169
    %p171 = scmp.ne.s32.totalorder %s162, %s163
    %p172 = scmp.eq.s32.totalorder %s26, 0
    %p173 = por %p171, %p172
    %p174 = scmp.ne.s32.totalorder %s162, %s163
    %p175 = scmp.eq.s32.totalorder %s27, 1
    %p176 = por %p174, %p175
    %p178 = scmp.ne.s32.totalorder %s163, %s177
    %p179 = scmp.eq.s32.totalorder %s27, 0
    %p180 = por %p178, %p179
    %s182 = sadd.s32 %s181, 1
    %p185 = scmp.eq.s32.totalorder %s21, 1
    %p186 = scmp.ne.s32.totalorder %s181, %s183
    %p187 = scmp.eq.s32.totalorder %s21, 0
    %p188 = por %p186, %p187
    %p189 = scmp.ne.s32.totalorder %s181, %s183
    %p190 = scmp.eq.s32.totalorder %s26, 1
    %p191 = por %p189, %p190
    %p192 = scmp.ne.s32.totalorder %s183, %s184
    %p193 = scmp.eq.s32.totalorder %s26, 0
    %p194 = por %p192, %p193
    %p195 = scmp.ne.s32.totalorder %s183, %s184
    %p196 = scmp.eq.s32.totalorder %s27, 1
    %p197 = por %p195, %p196
    %p199 = scmp.ne.s32.totalorder %s184, %s198
    %p200 = scmp.eq.s32.totalorder %s27, 0
    %p201 = por %p199, %p200
    %s203 = sadd.s32 %s202, 1
    %p206 = scmp.eq.s32.totalorder %s21, 1
    %p207 = scmp.ne.s32.totalorder %s202, %s204
    %p208 = scmp.eq.s32.totalorder %s21, 0
    %p209 = por %p207, %p208
    %p210 = scmp.ne.s32.totalorder %s202, %s204
    %p211 = scmp.eq.s32.totalorder %s26, 1
    %p212 = por %p210, %p211
    %p213 = scmp.ne.s32.totalorder %s204, %s205
    %p214 = scmp.eq.s32.totalorder %s26, 0
    %p215 = por %p213, %p214
    %p216 = scmp.ne.s32.totalorder %s204, %s205
    %p217 = scmp.eq.s32.totalorder %s27, 1
    %p218 = por %p216, %p217
    %p220 = scmp.ne.s32.totalorder %s205, %s219
    %p221 = scmp.eq.s32.totalorder %s27, 0
    %p222 = por %p220, %p221
    %s224 = sadd.s32 %s223, 1
    %p227 = scmp.eq.s32.totalorder %s21, 1
    %p228 = scmp.ne.s32.totalorder %s223, %s225
    %p229 = scmp.eq.s32.totalorder %s21, 0
    %p230 = por %p228, %p229
    %p231 = scmp.ne.s32.totalorder %s223, %s225
    %p232 = scmp.eq.s32.totalorder %s26, 1
    %p233 = por %p231, %p232
    %p234 = scmp.ne.s32.totalorder %s225, %s226
    %p235 = scmp.eq.s32.totalorder %s26, 0
    %p236 = por %p234, %p235
    %p237 = scmp.ne.s32.totalorder %s225, %s226
    %p238 = scmp.eq.s32.totalorder %s27, 1
    %p239 = por %p237, %p238
    %p241 = scmp.ne.s32.totalorder %s226, %s240
    %p242 = scmp.eq.s32.totalorder %s27, 0
    %p243 = por %p241, %p242
    %s245 = sadd.s32 %s244, 1
    %p248 = scmp.eq.s32.totalorder %s21, 1
    %p249 = scmp.ne.s32.totalorder %s244, %s246
    %p250 = scmp.eq.s32.totalorder %s21, 0
    %p251 = por %p249, %p250
    %p252 = scmp.ne.s32.totalorder %s244, %s246
    %p253 = scmp.eq.s32.totalorder %s26, 1
    %p254 = por %p252, %p253
    %p255 = scmp.ne.s32.totalorder %s246, %s247
    %p256 = scmp.eq.s32.totalorder %s26, 0
    %p257 = por %p255, %p256
    %p258 = scmp.ne.s32.totalorder %s246, %s247
    %p259 = scmp.eq.s32.totalorder %s27, 1
    %p260 = por %p258, %p259
    %p262 = scmp.ne.s32.totalorder %s247, %s261
    %p263 = scmp.eq.s32.totalorder %s27, 0
    %p264 = por %p262, %p263
    %s266 = sadd.s32 %s265, 1
    %p269 = scmp.eq.s32.totalorder %s21, 1
    %p270 = scmp.ne.s32.totalorder %s265, %s267
    %p271 = scmp.eq.s32.totalorder %s21, 0
    %p272 = por %p270, %p271
    %p273 = scmp.ne.s32.totalorder %s265, %s267
    %p274 = scmp.eq.s32.totalorder %s26, 1
    %p275 = por %p273, %p274
    %p276 = scmp.ne.s32.totalorder %s267, %s268
    %p277 = scmp.eq.s32.totalorder %s26, 0
    %p278 = por %p276, %p277
    %p279 = scmp.ne.s32.totalorder %s267, %s268
    %p280 = scmp.eq.s32.totalorder %s27, 1
    %p281 = por %p279, %p280
    %p283 = scmp.ne.s32.totalorder %s268, %s282
    %p284 = scmp.eq.s32.totalorder %s27, 0
    %p285 = por %p283, %p284
    %s287 = sadd.s32 %s286, 1
    %p290 = scmp.eq.s32.totalorder %s21, 1
    %p291 = scmp.ne.s32.totalorder %s286, %s288
    %p292 = scmp.eq.s32.totalorder %s21, 0
    %p293 = por %p291, %p292
    %p294 = scmp.ne.s32.totalorder %s286, %s288
    %p295 = scmp.eq.s32.totalorder %s26, 1
    %p296 = por %p294, %p295
    %p297 = scmp.ne.s32.totalorder %s288, %s289
    %p298 = scmp.eq.s32.totalorder %s26, 0
    %p299 = por %p297, %p298
    %p300 = scmp.ne.s32.totalorder %s288, %s289
    %p301 = scmp.eq.s32.totalorder %s27, 1
    %p302 = por %p300, %p301
    %p304 = scmp.ne.s32.totalorder %s289, %s303
    %p305 = scmp.eq.s32.totalorder %s27, 0
    %p306 = por %p304, %p305
    %s308 = sadd.s32 %s307, 1
    %p311 = scmp.eq.s32.totalorder %s21, 1
    %p312 = scmp.ne.s32.totalorder %s307, %s309
    %p313 = scmp.eq.s32.totalorder %s21, 0
    %p314 = por %p312, %p313
    %p315 = scmp.ne.s32.totalorder %s307, %s309
    %p316 = scmp.eq.s32.totalorder %s26, 1
    %p317 = por %p315, %p316
    %p318 = scmp.ne.s32.totalorder %s309, %s310
    %p319 = scmp.eq.s32.totalorder %s26, 0
    %p320 = por %p318, %p319
    %p321 = scmp.ne.s32.totalorder %s309, %s310
    %p322 = scmp.eq.s32.totalorder %s27, 1
    %p323 = por %p321, %p322
    %p325 = scmp.ne.s32.totalorder %s310, %s324
    %p326 = scmp.eq.s32.totalorder %s27, 0
    %p327 = por %p325, %p326
    %s329 = sadd.s32 %s328, 1
    %p332 = scmp.eq.s32.totalorder %s21, 1
    %p333 = scmp.ne.s32.totalorder %s328, %s330
    %p334 = scmp.eq.s32.totalorder %s21, 0
    %p335 = por %p333, %p334
    %p336 = scmp.ne.s32.totalorder %s328, %s330
    %p337 = scmp.eq.s32.totalorder %s26, 1
    %p338 = por %p336, %p337
    %p339 = scmp.ne.s32.totalorder %s330, %s331
    %p340 = scmp.eq.s32.totalorder %s26, 0
    %p341 = por %p339, %p340
    %p342 = scmp.ne.s32.totalorder %s330, %s331
    %p343 = scmp.eq.s32.totalorder %s27, 1
    %p344 = por %p342, %p343
    %p346 = scmp.ne.s32.totalorder %s331, %s345
    %p347 = scmp.eq.s32.totalorder %s27, 0
    %p348 = por %p346, %p347
    %s349 = ssub.s32 %s21, %s28
    %p350 = scmp.eq.s32.totalorder %s349, 0
    %s352 = sadd.s32 %s351, 1
    %s353 = scalar_select %p350, %s351, %s352
    %p356 = pneg %p350
    %p357 = scmp.eq.s32.totalorder %s21, 1
    %p358 = por %p356, %p357
    %p359 = scmp.ne.s32.totalorder %s351, %s354
    %p360 = scmp.eq.s32.totalorder %s21, 0
    %p361 = por %p359, %p360
    %p362 = scmp.ne.s32.totalorder %s351, %s354
    %p363 = scmp.eq.s32.totalorder %s26, 1
    %p364 = por %p362, %p363
    %p365 = scmp.ne.s32.totalorder %s354, %s355
    %p366 = scmp.eq.s32.totalorder %s26, 0
    %p367 = por %p365, %p366
    %p368 = scmp.ne.s32.totalorder %s354, %s355
    %p369 = scmp.eq.s32.totalorder %s27, 1
    %p370 = por %p368, %p369
    %p372 = scmp.ne.s32.totalorder %s355, %s371
    %p373 = scmp.eq.s32.totalorder %s27, 0
    %p374 = por %p372, %p373
    %p375 = scmp.le.s32.totalorder 1, %s21
    %p376 = scmp.lt.s32.totalorder %s21, 3
    %p377 = pnand %p375, %p376
    %p378 = pneg %p377
    // Predicated region
    $region9: #{vae_forward.1} parent=5 // pred_check
      _
    $region10: #{vae_forward.1} parent=5 // pred_check_branch
      %380 = sbr.rel (%p377) target = $region12
    $region11: #{vae_forward.1} parent=5 // pred_region
      %s381 = ssub.s32 %s21, 1
      // Predicated region
      $region13: #{vae_forward.1} parent=11 // pred_check
        %p382 = pneg %p68
      $region14: #{vae_forward.1} parent=11 // pred_check_branch
        %384 = sbr.rel (%p382) target = $region16
      $region15: #{vae_forward.1} parent=11 // pred_region
        _
      $region16: #{vae_forward.1} parent=11 // pred_fallthru
        _
      // Predicated region
      $region17: #{vae_forward.1} parent=11 // pred_check
        %p385 = pneg %p89
      $region18: #{vae_forward.1} parent=11 // pred_check_branch
        %387 = sbr.rel (%p385) target = $region20
      $region19: #{vae_forward.1} parent=11 // pred_region
        _
      $region20: #{vae_forward.1} parent=11 // pred_fallthru
        _
      // Predicated region
      $region21: #{vae_forward.1} parent=11 // pred_check
        %p388 = pneg %p110
      $region22: #{vae_forward.1} parent=11 // pred_check_branch
        %390 = sbr.rel (%p388) target = $region24
      $region23: #{vae_forward.1} parent=11 // pred_region
        _
      $region24: #{vae_forward.1} parent=11 // pred_fallthru
        _
      // Predicated region
      $region25: #{vae_forward.1} parent=11 // pred_check
        %p391 = pneg %p131
      $region26: #{vae_forward.1} parent=11 // pred_check_branch
        %393 = sbr.rel (%p391) target = $region28
      $region27: #{vae_forward.1} parent=11 // pred_region
        _
      $region28: #{vae_forward.1} parent=11 // pred_fallthru
        _
      // Predicated region
      $region29: #{vae_forward.1} parent=11 // pred_check
        %p394 = pneg %p152
      $region30: #{vae_forward.1} parent=11 // pred_check_branch
        %396 = sbr.rel (%p394) target = $region32
      $region31: #{vae_forward.1} parent=11 // pred_region
        _
      $region32: #{vae_forward.1} parent=11 // pred_fallthru
        _
      // Predicated region
      $region33: #{vae_forward.1} parent=11 // pred_check
        %p397 = pneg %p173
      $region34: #{vae_forward.1} parent=11 // pred_check_branch
        %399 = sbr.rel (%p397) target = $region36
      $region35: #{vae_forward.1} parent=11 // pred_region
        _
      $region36: #{vae_forward.1} parent=11 // pred_fallthru
        _
      // Predicated region
      $region37: #{vae_forward.1} parent=11 // pred_check
        %p400 = pneg %p194
      $region38: #{vae_forward.1} parent=11 // pred_check_branch
        %402 = sbr.rel (%p400) target = $region40
      $region39: #{vae_forward.1} parent=11 // pred_region
        _
      $region40: #{vae_forward.1} parent=11 // pred_fallthru
        _
      // Predicated region
      $region41: #{vae_forward.1} parent=11 // pred_check
        %p403 = pneg %p215
      $region42: #{vae_forward.1} parent=11 // pred_check_branch
        %405 = sbr.rel (%p403) target = $region44
      $region43: #{vae_forward.1} parent=11 // pred_region
        _
      $region44: #{vae_forward.1} parent=11 // pred_fallthru
        _
      // Predicated region
      $region45: #{vae_forward.1} parent=11 // pred_check
        %p406 = pneg %p236
      $region46: #{vae_forward.1} parent=11 // pred_check_branch
        %408 = sbr.rel (%p406) target = $region48
      $region47: #{vae_forward.1} parent=11 // pred_region
        _
      $region48: #{vae_forward.1} parent=11 // pred_fallthru
        _
      // Predicated region
      $region49: #{vae_forward.1} parent=11 // pred_check
        %p409 = pneg %p257
      $region50: #{vae_forward.1} parent=11 // pred_check_branch
        %411 = sbr.rel (%p409) target = $region52
      $region51: #{vae_forward.1} parent=11 // pred_region
        _
      $region52: #{vae_forward.1} parent=11 // pred_fallthru
        _
      // Predicated region
      $region53: #{vae_forward.1} parent=11 // pred_check
        %p412 = pneg %p278
      $region54: #{vae_forward.1} parent=11 // pred_check_branch
        %414 = sbr.rel (%p412) target = $region56
      $region55: #{vae_forward.1} parent=11 // pred_region
        _
      $region56: #{vae_forward.1} parent=11 // pred_fallthru
        _
      // Predicated region
      $region57: #{vae_forward.1} parent=11 // pred_check
        %p415 = pneg %p299
      $region58: #{vae_forward.1} parent=11 // pred_check_branch
        %417 = sbr.rel (%p415) target = $region60
      $region59: #{vae_forward.1} parent=11 // pred_region
        _
      $region60: #{vae_forward.1} parent=11 // pred_fallthru
        _
      // Predicated region
      $region61: #{vae_forward.1} parent=11 // pred_check
        %p418 = pneg %p320
      $region62: #{vae_forward.1} parent=11 // pred_check_branch
        %420 = sbr.rel (%p418) target = $region64
      $region63: #{vae_forward.1} parent=11 // pred_region
        _
      $region64: #{vae_forward.1} parent=11 // pred_fallthru
        _
      // Predicated region
      $region65: #{vae_forward.1} parent=11 // pred_check
        %p421 = pneg %p341
      $region66: #{vae_forward.1} parent=11 // pred_check_branch
        %423 = sbr.rel (%p421) target = $region68
      $region67: #{vae_forward.1} parent=11 // pred_region
        _
      $region68: #{vae_forward.1} parent=11 // pred_fallthru
        _
    $region12: #{vae_forward.1} parent=5 // pred_fallthru
      _
    %p424 = scmp.lt.s32.totalorder %s21, 2
    // Predicated region
    $region69: #{vae_forward.1} parent=5 // pred_check
      %p425 = pneg %p424
    $region70: #{vae_forward.1} parent=5 // pred_check_branch
      %427 = sbr.rel (%p425) target = $region72
    $region71: #{vae_forward.1} parent=5 // pred_region
      // Predicated region
      $region73: #{vae_forward.1} parent=71 // pred_check
        %p428 = pneg %p41
      $region74: #{vae_forward.1} parent=71 // pred_check_branch
        %430 = sbr.rel (%p428) target = $region76
      $region75: #{vae_forward.1} parent=71 // pred_region
        %s431 = smul.u32 4, %s21
        %p432 = scmp.lt.s32.totalorder %s431, 7
        %s433 = scalar_select %p432, %s431, 7
        %s434 = smul.addr %s433, 4
        %s435 = scalar_lea.vmem %s0, %s434
        %s436 = smul.u32 4, %s21
      $region76: #{vae_forward.1} parent=71 // pred_fallthru
        _
    $region72: #{vae_forward.1} parent=5 // pred_fallthru
      _
    %p437 = scmp.le.s32.totalorder 1, %s21
    %p438 = scmp.lt.s32.totalorder %s21, 3
    %p439 = pnand %p437, %p438
    %p440 = pneg %p439
    // Predicated region
    $region77: #{vae_forward.1} parent=5 // pred_check
      _
    $region78: #{vae_forward.1} parent=5 // pred_check_branch
      %442 = sbr.rel (%p439) target = $region80
    $region79: #{vae_forward.1} parent=5 // pred_region
      %s443 = ssub.s32 %s21, 1
      %s444 = smul.u32 4, %s26
      %p445 = scmp.lt.s32.totalorder %s444, 7
      %s446 = scalar_select %p445, %s444, 7
      %s447 = smul.addr %s446, 4
      %s448 = scalar_lea.vmem %s0, %s447
      %p449 = pneg %p47
      %p450 = pneg %p44
      %p451 = pneg %p68
      %p452 = pneg %p65
      %p453 = pneg %p89
      %p454 = pneg %p86
      %p455 = pneg %p110
      %p456 = pneg %p107
      %p457 = pneg %p131
      %p458 = pneg %p128
      %p459 = pneg %p152
      %p460 = pneg %p149
      %p461 = pneg %p173
      %p462 = pneg %p170
      %p463 = pneg %p194
      %p464 = pneg %p191
      %p465 = pneg %p215
      %p466 = pneg %p212
      %p467 = pneg %p236
      %p468 = pneg %p233
      %p469 = pneg %p257
      %p470 = pneg %p254
      %p471 = pneg %p278
      %p472 = pneg %p275
      %p473 = pneg %p299
      %p474 = pneg %p296
      %p475 = pneg %p320
      %p476 = pneg %p317
      %p477 = pneg %p341
      %p478 = pneg %p338
      %p479 = pneg %p367
      %p480 = pneg %p364
      %s481 = smul.u32 4, %s26
      %p482 = scmp.lt.s32.totalorder %s481, 7
      %s483 = scalar_select %p482, %s481, 7
      %s484 = smul.addr %s483, 8
      %s485 = scalar_lea.vmem %s15, %s484
      %s486 = smul.u32 4, %s26
      %p487 = scmp.lt.s32.totalorder %s486, 7
      %s488 = scalar_select %p487, %s486, 7
      %s489 = smul.addr %s488, 4
      %s490 = scalar_lea.vmem %s0, %s489
      %s491 = smul.u32 4, %s26
      %s492 = smul.u32 4, %s26
      %p493 = scmp.lt.s32.totalorder %s492, 7
      %s494 = scalar_select %p493, %s492, 7
      %s495 = smul.addr %s494, 8
      %s496 = scalar_lea.vmem %s15, %s495
      %s497 = smul.u32 4, %s26
      %v498 = vld [vmem:[%s490] sm:$0xf]
      %v499 = vld [vmem:[%s490 + $0x4] sm:$0xf]
      %v500 = vld [vmem:[%s490 + $0x8] sm:$0xf]
      %v501 = vld [vmem:[%s490 + $0xc] sm:$0xf]
      %v502 = vunpack.c.l.bf16 %v498
      %v503 = vunpack.c.l.bf16 %v499
      %v504 = vunpack.c.l.bf16 %v500
      %v505 = vunpack.c.l.bf16 %v501
      %v506 = vld [vmem:[%s1] sm:$0xff]
      %v507 = vld [vmem:[%s1 + $0x8] sm:$0xff]
      %v508 = vld [vmem:[%s1 + $0x10] sm:$0xff]
      %v509 = vld [vmem:[%s1 + $0x18] sm:$0xff]
      %v510 = vld [vmem:[%s1 + $0x20] sm:$0xff]
      %v511 = vld [vmem:[%s1 + $0x28] sm:$0xff]
      %v512 = vld [vmem:[%s1 + $0x30] sm:$0xff]
      %v513 = vld [vmem:[%s1 + $0x38] sm:$0xff]
      %v514 = vld [vmem:[%s1 + $0x40] sm:$0xff]
      %v515 = vld [vmem:[%s1 + $0x48] sm:$0xff]
      %v516 = vld [vmem:[%s1 + $0x50] sm:$0xff]
      %v517 = vld [vmem:[%s1 + $0x58] sm:$0xff]
      %v518 = vld [vmem:[%s1 + $0x60] sm:$0xff]
      %v519 = vld [vmem:[%s1 + $0x68] sm:$0xff]
      %v520 = vld [vmem:[%s1 + $0x70] sm:$0xff]
      %v521 = vld [vmem:[%s1 + $0x78] sm:$0xff]
      %v522 = vld [vmem:[%s2] sm:$0x1]
      %v524 = vlaneseq
      %v525 = vshrl.u32 %v524, 7
      %v526 = vsub.s32 0, %v525
      %v527 = vrot.slane %v522, %v526
      %529 = vmatprep.subr.mxu0 0.0
      %530 = vmatpush1.msra.mxu0 %v521
      %531 = vmatprep.subr.mxu0 0.0
      %532 = vmatpush1.msra.mxu0 %v520
      %533 = vmatprep.subr.mxu0 0.0
      %534 = vmatpush1.msra.mxu0 %v519
      %535 = vmatprep.subr.mxu0 0.0
      %536 = vmatpush1.msra.mxu0 %v518
      %537 = vmatprep.subr.mxu0 0.0
      %538 = vmatpush1.msra.mxu0 %v517
      %539 = vmatprep.subr.mxu0 0.0
      %540 = vmatpush1.msra.mxu0 %v516
      %541 = vmatprep.subr.mxu0 0.0
      %542 = vmatpush1.msra.mxu0 %v515
      %543 = vmatprep.subr.mxu0 0.0
      %544 = vmatpush1.msra.mxu0 %v514
      %545 = vmatprep.subr.mxu0 0.0
      %546 = vmatpush1.msra.mxu0 %v513
      %547 = vmatprep.subr.mxu0 0.0
      %548 = vmatpush1.msra.mxu0 %v512
      %549 = vmatprep.subr.mxu0 0.0
      %550 = vmatpush1.msra.mxu0 %v511
      %551 = vmatprep.subr.mxu0 0.0
      %552 = vmatpush1.msra.mxu0 %v510
      %553 = vmatprep.subr.mxu0 0.0
      %554 = vmatpush1.msra.mxu0 %v509
      %555 = vmatprep.subr.mxu0 0.0
      %556 = vmatpush1.msra.mxu0 %v508
      %557 = vmatprep.subr.mxu0 0.0
      %558 = vmatpush1.msra.mxu0 %v507
      %559 = vmatprep.subr.mxu0 0.0
      %560 = vmatpush1.msra.mxu0 %v506
      %561 = vmatprep.subr.mxu0 0.0
      %562 = vmatpush2.msra.mxu0 0.0
      %563 = vmatprep.subr.mxu0 0.0
      %564 = vmatpush2.msra.mxu0 0.0
      %565 = vmatprep.subr.mxu0 0.0
      %566 = vmatpush2.msra.mxu0 0.0
      %567 = vmatprep.subr.mxu0 0.0
      %568 = vmatpush2.msra.mxu0 0.0
      %569 = vmatprep.subr.mxu0 0.0
      %570 = vmatpush2.msra.mxu0 0.0
      %571 = vmatprep.subr.mxu0 0.0
      %572 = vmatpush2.msra.mxu0 0.0
      %573 = vmatprep.subr.mxu0 0.0
      %574 = vmatpush2.msra.mxu0 0.0
      %575 = vmatprep.subr.mxu0 0.0
      %576 = vmatpush2.msra.mxu0 0.0
      %577 = vmatprep.subr.mxu0 0.0
      %578 = vmatpush2.msra.mxu0 0.0
      %579 = vmatprep.subr.mxu0 0.0
      %580 = vmatpush2.msra.mxu0 0.0
      %581 = vmatprep.subr.mxu0 0.0
      %582 = vmatpush2.msra.mxu0 0.0
      %583 = vmatprep.subr.mxu0 0.0
      %584 = vmatpush2.msra.mxu0 0.0
      %585 = vmatprep.subr.mxu0 0.0
      %586 = vmatpush2.msra.mxu0 0.0
      %587 = vmatprep.subr.mxu0 0.0
      %588 = vmatpush2.msra.mxu0 0.0
      %589 = vmatprep.subr.mxu0 0.0
      %590 = vmatpush2.msra.mxu0 0.0
      %591 = vmatprep.subr.mxu0 0.0
      %592 = vmatpush2.msra.mxu0 0.0
      %593 = vmatprep.mubr.f32.mxu0 0.0
      %594 = vmatmul.mubr.f32.gmra.mxu0 %v502
      %v595 = vpop.f32.mrf.mxu0
      %v596 = vadd.f32 %v527, %v595
      %v597 = vpop.f32.mrf.mxu0
      %598 = vmatprep.mubr.f32.mxu0 0.0
      %599 = vmatmul.mubr.f32.gmra.mxu0 %v503
      %v600 = vpop.f32.mrf.mxu0
      %v601 = vadd.f32 %v527, %v600
      %v602 = vpop.f32.mrf.mxu0
      %603 = vmatprep.mubr.f32.mxu0 0.0
      %604 = vmatmul.mubr.f32.gmra.mxu0 %v504
      %v605 = vpop.f32.mrf.mxu0
      %v606 = vadd.f32 %v527, %v605
      %v607 = vpop.f32.mrf.mxu0
      %608 = vmatprep.mubr.f32.mxu0 0.0
      %609 = vmatmul.mubr.f32.gmra.mxu0 %v505
      %v610 = vpop.f32.mrf.mxu0
      %v611 = vadd.f32 %v527, %v610
      %v612 = vpop.f32.mrf.mxu0
      %613 = vdwg.mxu0
      %v614 = vmax.f32 %v596, 0.0
      %v615 = vmax.f32 %v601, 0.0
      %v616 = vmax.f32 %v606, 0.0
      %v617 = vmax.f32 %v611, 0.0
      %v618 = vld [vmem:[%s3] sm:$0xff]
      %v619 = vld [vmem:[%s3 + $0x8] sm:$0xff]
      %v620 = vld [vmem:[%s3 + $0x10] sm:$0xff]
      %v621 = vld [vmem:[%s3 + $0x18] sm:$0xff]
      %v622 = vld [vmem:[%s3 + $0x20] sm:$0xff]
      %v623 = vld [vmem:[%s3 + $0x28] sm:$0xff]
      %v624 = vld [vmem:[%s3 + $0x30] sm:$0xff]
      %v625 = vld [vmem:[%s3 + $0x38] sm:$0xff]
      %v626 = vld [vmem:[%s4] sm:$0x1]
      %v628 = vlaneseq
      %v629 = vshrl.u32 %v628, 7
      %v630 = vsub.s32 0, %v629
      %v631 = vrot.slane %v626, %v630
      %vm633 = vcmask 523264
      %v635 = vsel %vm633, %v614, 0
      %v638 = vsel %vm633, %v615, 0
      %v641 = vsel %vm633, %v616, 0
      %v644 = vsel %vm633, %v617, 0
      %646 = vmatprep.subr.mxu0 0.0
      %647 = vmatpush1.msra.mxu0 0.0
      %648 = vmatprep.subr.mxu0 0.0
      %649 = vmatpush1.msra.mxu0 0.0
      %650 = vmatprep.subr.mxu0 0.0
      %651 = vmatpush1.msra.mxu0 0.0
      %652 = vmatprep.subr.mxu0 0.0
      %653 = vmatpush1.msra.mxu0 0.0
      %654 = vmatprep.subr.mxu0 0.0
      %655 = vmatpush1.msra.mxu0 0.0
      %656 = vmatprep.subr.mxu0 0.0
      %657 = vmatpush1.msra.mxu0 0.0
      %658 = vmatprep.subr.mxu0 0.0
      %659 = vmatpush1.msra.mxu0 0.0
      %660 = vmatprep.subr.mxu0 0.0
      %661 = vmatpush1.msra.mxu0 0.0
      %662 = vmatprep.subr.mxu0 0.0
      %663 = vmatpush1.msra.mxu0 %v625
      %664 = vmatprep.subr.mxu0 0.0
      %665 = vmatpush1.msra.mxu0 %v624
      %666 = vmatprep.subr.mxu0 0.0
      %667 = vmatpush1.msra.mxu0 %v623
      %668 = vmatprep.subr.mxu0 0.0
      %669 = vmatpush1.msra.mxu0 %v622
      %670 = vmatprep.subr.mxu0 0.0
      %671 = vmatpush1.msra.mxu0 %v621
      %672 = vmatprep.subr.mxu0 0.0
      %673 = vmatpush1.msra.mxu0 %v620
      %674 = vmatprep.subr.mxu0 0.0
      %675 = vmatpush1.msra.mxu0 %v619
      %676 = vmatprep.subr.mxu0 0.0
      %677 = vmatpush1.msra.mxu0 %v618
      %678 = vmatprep.subr.mxu0 0.0
      %679 = vmatpush2.msra.mxu0 0.0
      %680 = vmatprep.subr.mxu0 0.0
      %681 = vmatpush2.msra.mxu0 0.0
      %682 = vmatprep.subr.mxu0 0.0
      %683 = vmatpush2.msra.mxu0 0.0
      %684 = vmatprep.subr.mxu0 0.0
      %685 = vmatpush2.msra.mxu0 0.0
      %686 = vmatprep.subr.mxu0 0.0
      %687 = vmatpush2.msra.mxu0 0.0
      %688 = vmatprep.subr.mxu0 0.0
      %689 = vmatpush2.msra.mxu0 0.0
      %690 = vmatprep.subr.mxu0 0.0
      %691 = vmatpush2.msra.mxu0 0.0
      %692 = vmatprep.subr.mxu0 0.0
      %693 = vmatpush2.msra.mxu0 0.0
      %694 = vmatprep.subr.mxu0 0.0
      %695 = vmatpush2.msra.mxu0 0.0
      %696 = vmatprep.subr.mxu0 0.0
      %697 = vmatpush2.msra.mxu0 0.0
      %698 = vmatprep.subr.mxu0 0.0
      %699 = vmatpush2.msra.mxu0 0.0
      %700 = vmatprep.subr.mxu0 0.0
      %701 = vmatpush2.msra.mxu0 0.0
      %702 = vmatprep.subr.mxu0 0.0
      %703 = vmatpush2.msra.mxu0 0.0
      %704 = vmatprep.subr.mxu0 0.0
      %705 = vmatpush2.msra.mxu0 0.0
      %706 = vmatprep.subr.mxu0 0.0
      %707 = vmatpush2.msra.mxu0 0.0
      %708 = vmatprep.subr.mxu0 0.0
      %709 = vmatpush2.msra.mxu0 0.0
      %710 = vmatprep.mubr.f32.mxu0 0.0
      %711 = vmatmul.mubr.f32.gmra.mxu0 %v635
      %v712 = vpop.f32.mrf.mxu0
      %v713 = vadd.f32 %v631, %v712
      %v714 = vpop.f32.mrf.mxu0
      %715 = vmatprep.mubr.f32.mxu0 0.0
      %716 = vmatmul.mubr.f32.gmra.mxu0 %v638
      %v717 = vpop.f32.mrf.mxu0
      %v718 = vadd.f32 %v631, %v717
      %v719 = vpop.f32.mrf.mxu0
      %720 = vmatprep.mubr.f32.mxu0 0.0
      %721 = vmatmul.mubr.f32.gmra.mxu0 %v641
      %v722 = vpop.f32.mrf.mxu0
      %v723 = vadd.f32 %v631, %v722
      %v724 = vpop.f32.mrf.mxu0
      %725 = vmatprep.mubr.f32.mxu0 0.0
      %726 = vmatmul.mubr.f32.gmra.mxu0 %v644
      %v727 = vpop.f32.mrf.mxu0
      %v728 = vadd.f32 %v631, %v727
      %v729 = vpop.f32.mrf.mxu0
      %730 = vdwg.mxu0
      %v731 = vmax.f32 %v713, 0.0
      %v732 = vmax.f32 %v718, 0.0
      %v733 = vmax.f32 %v723, 0.0
      %v734 = vmax.f32 %v728, 0.0
      %v735 = vld [vmem:[%s5] sm:$0xff]
      %v736 = vld [vmem:[%s5 + $0x8] sm:$0xff]
      %v737 = vld [vmem:[%s5 + $0x10] sm:$0xff]
      %v738 = vld [vmem:[%s5 + $0x18] sm:$0xff]
      %v739 = vld [vmem:[%s6] sm:$0x1]
      %v741 = vlaneseq
      %v742 = vshrl.u32 %v741, 7
      %v743 = vsub.s32 0, %v742
      %v744 = vrot.slane %v739, %v743
      %vm746 = vcmask 261120
      %v748 = vsel %vm746, %v731, 0
      %v751 = vsel %vm746, %v732, 0
      %v754 = vsel %vm746, %v733, 0
      %v757 = vsel %vm746, %v734, 0
      %759 = vmatprep.subr.mxu0 0.0
      %760 = vmatpush1.msra.mxu0 0.0
      %761 = vmatprep.subr.mxu0 0.0
      %762 = vmatpush1.msra.mxu0 0.0
      %763 = vmatprep.subr.mxu0 0.0
      %764 = vmatpush1.msra.mxu0 0.0
      %765 = vmatprep.subr.mxu0 0.0
      %766 = vmatpush1.msra.mxu0 0.0
      %767 = vmatprep.subr.mxu0 0.0
      %768 = vmatpush1.msra.mxu0 0.0
      %769 = vmatprep.subr.mxu0 0.0
      %770 = vmatpush1.msra.mxu0 0.0
      %771 = vmatprep.subr.mxu0 0.0
      %772 = vmatpush1.msra.mxu0 0.0
      %773 = vmatprep.subr.mxu0 0.0
      %774 = vmatpush1.msra.mxu0 0.0
      %775 = vmatprep.subr.mxu0 0.0
      %776 = vmatpush1.msra.mxu0 0.0
      %777 = vmatprep.subr.mxu0 0.0
      %778 = vmatpush1.msra.mxu0 0.0
      %779 = vmatprep.subr.mxu0 0.0
      %780 = vmatpush1.msra.mxu0 0.0
      %781 = vmatprep.subr.mxu0 0.0
      %782 = vmatpush1.msra.mxu0 0.0
      %783 = vmatprep.subr.mxu0 0.0
      %784 = vmatpush1.msra.mxu0 %v738
      %785 = vmatprep.subr.mxu0 0.0
      %786 = vmatpush1.msra.mxu0 %v737
      %787 = vmatprep.subr.mxu0 0.0
      %788 = vmatpush1.msra.mxu0 %v736
      %789 = vmatprep.subr.mxu0 0.0
      %790 = vmatpush1.msra.mxu0 %v735
      %791 = vmatprep.subr.mxu0 0.0
      %792 = vmatpush2.msra.mxu0 0.0
      %793 = vmatprep.subr.mxu0 0.0
      %794 = vmatpush2.msra.mxu0 0.0
      %795 = vmatprep.subr.mxu0 0.0
      %796 = vmatpush2.msra.mxu0 0.0
      %797 = vmatprep.subr.mxu0 0.0
      %798 = vmatpush2.msra.mxu0 0.0
      %799 = vmatprep.subr.mxu0 0.0
      %800 = vmatpush2.msra.mxu0 0.0
      %801 = vmatprep.subr.mxu0 0.0
      %802 = vmatpush2.msra.mxu0 0.0
      %803 = vmatprep.subr.mxu0 0.0
      %804 = vmatpush2.msra.mxu0 0.0
      %805 = vmatprep.subr.mxu0 0.0
      %806 = vmatpush2.msra.mxu0 0.0
      %807 = vmatprep.subr.mxu0 0.0
      %808 = vmatpush2.msra.mxu0 0.0
      %809 = vmatprep.subr.mxu0 0.0
      %810 = vmatpush2.msra.mxu0 0.0
      %811 = vmatprep.subr.mxu0 0.0
      %812 = vmatpush2.msra.mxu0 0.0
      %813 = vmatprep.subr.mxu0 0.0
      %814 = vmatpush2.msra.mxu0 0.0
      %815 = vmatprep.subr.mxu0 0.0
      %816 = vmatpush2.msra.mxu0 0.0
      %817 = vmatprep.subr.mxu0 0.0
      %818 = vmatpush2.msra.mxu0 0.0
      %819 = vmatprep.subr.mxu0 0.0
      %820 = vmatpush2.msra.mxu0 0.0
      %821 = vmatprep.subr.mxu0 0.0
      %822 = vmatpush2.msra.mxu0 0.0
      %823 = vmatprep.mubr.f32.mxu0 0.0
      %824 = vmatmul.mubr.f32.gmra.mxu0 %v748
      %v825 = vpop.f32.mrf.mxu0
      %v826 = vadd.f32 %v744, %v825
      %v827 = vpop.f32.mrf.mxu0
      %828 = vmatprep.mubr.f32.mxu0 0.0
      %829 = vmatmul.mubr.f32.gmra.mxu0 %v751
      %v830 = vpop.f32.mrf.mxu0
      %v831 = vadd.f32 %v744, %v830
      %v832 = vpop.f32.mrf.mxu0
      %833 = vmatprep.mubr.f32.mxu0 0.0
      %834 = vmatmul.mubr.f32.gmra.mxu0 %v754
      %v835 = vpop.f32.mrf.mxu0
      %v836 = vadd.f32 %v744, %v835
      %v837 = vpop.f32.mrf.mxu0
      %838 = vmatprep.mubr.f32.mxu0 0.0
      %839 = vmatmul.mubr.f32.gmra.mxu0 %v757
      %v840 = vpop.f32.mrf.mxu0
      %v841 = vadd.f32 %v744, %v840
      %v842 = vpop.f32.mrf.mxu0
      %843 = vdwg.mxu0
      %v844 = vmax.f32 %v826, 0.0
      %v845 = vmax.f32 %v831, 0.0
      %v846 = vmax.f32 %v836, 0.0
      %v847 = vmax.f32 %v841, 0.0
      %v848 = vld [vmem:[%s7] sm:$0xff]
      %v849 = vld [vmem:[%s7 + $0x8] sm:$0xff]
      %v850 = vld [vmem:[%s8] sm:$0x1]
      %v852 = vlaneseq
      %v853 = vshrl.u32 %v852, 7
      %v854 = vsub.s32 0, %v853
      %v855 = vrot.slane %v850, %v854
      %vm857 = vcmask 130048
      %v859 = vsel %vm857, %v844, 0
      %v862 = vsel %vm857, %v845, 0
      %v865 = vsel %vm857, %v846, 0
      %v868 = vsel %vm857, %v847, 0
      %870 = vmatprep.subr.mxu0 0.0
      %871 = vmatpush1.msra.mxu0 0.0
      %872 = vmatprep.subr.mxu0 0.0
      %873 = vmatpush1.msra.mxu0 0.0
      %874 = vmatprep.subr.mxu0 0.0
      %875 = vmatpush1.msra.mxu0 0.0
      %876 = vmatprep.subr.mxu0 0.0
      %877 = vmatpush1.msra.mxu0 0.0
      %878 = vmatprep.subr.mxu0 0.0
      %879 = vmatpush1.msra.mxu0 0.0
      %880 = vmatprep.subr.mxu0 0.0
      %881 = vmatpush1.msra.mxu0 0.0
      %882 = vmatprep.subr.mxu0 0.0
      %883 = vmatpush1.msra.mxu0 0.0
      %884 = vmatprep.subr.mxu0 0.0
      %885 = vmatpush1.msra.mxu0 0.0
      %886 = vmatprep.subr.mxu0 0.0
      %887 = vmatpush1.msra.mxu0 0.0
      %888 = vmatprep.subr.mxu0 0.0
      %889 = vmatpush1.msra.mxu0 0.0
      %890 = vmatprep.subr.mxu0 0.0
      %891 = vmatpush1.msra.mxu0 0.0
      %892 = vmatprep.subr.mxu0 0.0
      %893 = vmatpush1.msra.mxu0 0.0
      %894 = vmatprep.subr.mxu0 0.0
      %895 = vmatpush1.msra.mxu0 0.0
      %896 = vmatprep.subr.mxu0 0.0
      %897 = vmatpush1.msra.mxu0 0.0
      %898 = vmatprep.subr.mxu0 0.0
      %899 = vmatpush1.msra.mxu0 %v849
      %900 = vmatprep.subr.mxu0 0.0
      %901 = vmatpush1.msra.mxu0 %v848
      %902 = vmatprep.subr.mxu0 0.0
      %903 = vmatpush2.msra.mxu0 0.0
      %904 = vmatprep.subr.mxu0 0.0
      %905 = vmatpush2.msra.mxu0 0.0
      %906 = vmatprep.subr.mxu0 0.0
      %907 = vmatpush2.msra.mxu0 0.0
      %908 = vmatprep.subr.mxu0 0.0
      %909 = vmatpush2.msra.mxu0 0.0
      %910 = vmatprep.subr.mxu0 0.0
      %911 = vmatpush2.msra.mxu0 0.0
      %912 = vmatprep.subr.mxu0 0.0
      %913 = vmatpush2.msra.mxu0 0.0
      %914 = vmatprep.subr.mxu0 0.0
      %915 = vmatpush2.msra.mxu0 0.0
      %916 = vmatprep.subr.mxu0 0.0
      %917 = vmatpush2.msra.mxu0 0.0
      %918 = vmatprep.subr.mxu0 0.0
      %919 = vmatpush2.msra.mxu0 0.0
      %920 = vmatprep.subr.mxu0 0.0
      %921 = vmatpush2.msra.mxu0 0.0
      %922 = vmatprep.subr.mxu0 0.0
      %923 = vmatpush2.msra.mxu0 0.0
      %924 = vmatprep.subr.mxu0 0.0
      %925 = vmatpush2.msra.mxu0 0.0
      %926 = vmatprep.subr.mxu0 0.0
      %927 = vmatpush2.msra.mxu0 0.0
      %928 = vmatprep.subr.mxu0 0.0
      %929 = vmatpush2.msra.mxu0 0.0
      %930 = vmatprep.subr.mxu0 0.0
      %931 = vmatpush2.msra.mxu0 0.0
      %932 = vmatprep.subr.mxu0 0.0
      %933 = vmatpush2.msra.mxu0 0.0
      %934 = vmatprep.mubr.f32.mxu0 0.0
      %935 = vmatmul.mubr.f32.gmra.mxu0 %v859
      %v936 = vpop.f32.mrf.mxu0
      %v937 = vadd.f32 %v855, %v936
      %v938 = vpop.f32.mrf.mxu0
      %939 = vmatprep.mubr.f32.mxu0 0.0
      %940 = vmatmul.mubr.f32.gmra.mxu0 %v862
      %v941 = vpop.f32.mrf.mxu0
      %v942 = vadd.f32 %v855, %v941
      %v943 = vpop.f32.mrf.mxu0
      %944 = vmatprep.mubr.f32.mxu0 0.0
      %945 = vmatmul.mubr.f32.gmra.mxu0 %v865
      %v946 = vpop.f32.mrf.mxu0
      %v947 = vadd.f32 %v855, %v946
      %v948 = vpop.f32.mrf.mxu0
      %949 = vmatprep.mubr.f32.mxu0 0.0
      %950 = vmatmul.mubr.f32.gmra.mxu0 %v868
      %v951 = vpop.f32.mrf.mxu0
      %v952 = vadd.f32 %v855, %v951
      %v953 = vpop.f32.mrf.mxu0
      %954 = vdwg.mxu0
      %v955 = vmul.f32 %v937, 0.5
      %v956 = vmul.f32 %v942, 0.5
      %v957 = vmul.f32 %v947, 0.5
      %v958 = vmul.f32 %v952, 0.5
      %v959 = vmul.f32 %v955, 1.442695
      %v960 = vpow.pop %v959
      %v961 = vmul.f32 %v956, 1.442695
      %v962 = vpow.pop %v961
      %v963 = vmul.f32 %v957, 1.442695
      %v964 = vpow.pop %v963
      %v965 = vmul.f32 %v958, 1.442695
      %v966 = vpow.pop %v965
      %971 = vrot.lane.b32.xlu0 %v502, 30
      %v972 = vpop.permute.xlu0 %971
      %973 = vrot.lane.b32.xlu0 %v503, 30
      %v974 = vpop.permute.xlu0 %973
      %975 = vrot.lane.b32.xlu0 %v504, 30
      %v976 = vpop.permute.xlu0 %975
      %977 = vrot.lane.b32.xlu0 %v505, 30
      %v978 = vpop.permute.xlu0 %977
      %v983 = vmul.f32 %v960, %v972
      %v984 = vmul.f32 %v962, %v974
      %v985 = vmul.f32 %v964, %v976
      %v986 = vmul.f32 %v966, %v978
      %991 = vrot.lane.b32.xlu0 %v983, 126
      %v992 = vpop.permute.xlu0 %991
      %993 = vrot.lane.b32.xlu0 %v984, 126
      %v994 = vpop.permute.xlu0 %993
      %995 = vrot.lane.b32.xlu0 %v985, 126
      %v996 = vpop.permute.xlu0 %995
      %997 = vrot.lane.b32.xlu0 %v986, 126
      %v998 = vpop.permute.xlu0 %997
      %v1003 = vadd.f32 %v937, %v992
      %v1004 = vadd.f32 %v942, %v994
      %v1005 = vadd.f32 %v947, %v996
      %v1006 = vadd.f32 %v952, %v998
      %1007 = vrot.lane.b32.xlu0 %v502, 34
      %v1008 = vpop.permute.xlu0 %1007
      %1009 = vrot.lane.b32.xlu0 %v503, 34
      %v1010 = vpop.permute.xlu0 %1009
      %1011 = vrot.lane.b32.xlu0 %v504, 34
      %v1012 = vpop.permute.xlu0 %1011
      %1013 = vrot.lane.b32.xlu0 %v505, 34
      %v1014 = vpop.permute.xlu0 %1013
      %v1019 = vmul.f32 %v937, %v1008
      %v1020 = vmul.f32 %v942, %v1010
      %v1021 = vmul.f32 %v947, %v1012
      %v1022 = vmul.f32 %v952, %v1014
      %1027 = vrot.lane.b32.xlu0 %v1019, 123
      %v1028 = vpop.permute.xlu0 %1027
      %1029 = vrot.lane.b32.xlu0 %v1020, 123
      %v1030 = vpop.permute.xlu0 %1029
      %1031 = vrot.lane.b32.xlu0 %v1021, 123
      %v1032 = vpop.permute.xlu0 %1031
      %1033 = vrot.lane.b32.xlu0 %v1022, 123
      %v1034 = vpop.permute.xlu0 %1033
      %v1039 = vadd.f32 %v937, %v1028
      %v1040 = vadd.f32 %v942, %v1030
      %v1041 = vadd.f32 %v947, %v1032
      %v1042 = vadd.f32 %v952, %v1034
      %v1043 = vadd.f32 %v1039, %v992
      %v1044 = vadd.f32 %v1040, %v994
      %v1045 = vadd.f32 %v1041, %v996
      %v1046 = vadd.f32 %v1042, %v998
      %v1047 = vld [vmem:[%s9] sm:$0x3]
      %1049 = vset.pattern.permute.xlu0 0
      %1050 = vperm.xlu0 %1049, %v1003
      %v1051 = vpop.permute.xlu0 %1050
      %1054 = vset.pattern.permute.xlu0 0
      %1055 = vperm.xlu0 %1054, %v1004
      %v1056 = vpop.permute.xlu0 %1055
      %1059 = vset.pattern.permute.xlu0 0
      %1060 = vperm.xlu0 %1059, %v1005
      %v1061 = vpop.permute.xlu0 %1060
      %1064 = vset.pattern.permute.xlu0 0
      %1065 = vperm.xlu0 %1064, %v1006
      %v1066 = vpop.permute.xlu0 %1065
      %v1068 = vlaneseq
      %v1069 = vshrl.u32 %v1068, 7
      %v1070 = vsub.s32 0, %v1069
      %v1071 = vrot.slane %v1047, %v1070
      %v1072 = vmul.f32 %v1051, %v1071
      %v1073 = vmul.f32 %v1056, %v1071
      %v1074 = vmul.f32 %v1061, %v1071
      %v1075 = vmul.f32 %v1066, %v1071
      %1077 = vset.pattern.permute.xlu0 1
      %1078 = vperm.xlu0 %1077, %v1043
      %v1079 = vpop.permute.xlu0 %1078
      %1082 = vset.pattern.permute.xlu0 1
      %1083 = vperm.xlu0 %1082, %v1044
      %v1084 = vpop.permute.xlu0 %1083
      %1087 = vset.pattern.permute.xlu0 1
      %1088 = vperm.xlu0 %1087, %v1045
      %v1089 = vpop.permute.xlu0 %1088
      %1092 = vset.pattern.permute.xlu0 1
      %1093 = vperm.xlu0 %1092, %v1046
      %v1094 = vpop.permute.xlu0 %1093
      %v1096 = vlaneseq
      %v1097 = vshrl.u32 %v1096, 7
      %v1098 = vsub.s32 1, %v1097
      %v1099 = vrot.slane %v1047, %v1098
      %v1100 = vmul.f32 %v1079, %v1099
      %v1101 = vmul.f32 %v1084, %v1099
      %v1102 = vmul.f32 %v1089, %v1099
      %v1103 = vmul.f32 %v1094, %v1099
      %v1104 = vadd.f32 %v1072, %v1100
      %v1105 = vadd.f32 %v1073, %v1101
      %v1106 = vadd.f32 %v1074, %v1102
      %v1107 = vadd.f32 %v1075, %v1103
      %v1108 = vld [vmem:[%s10] sm:$0x1]
      %v1110 = vlaneseq
      %v1111 = vshrl.u32 %v1110, 7
      %v1112 = vsub.s32 0, %v1111
      %v1113 = vrot.slane %v1108, %v1112
      %v1115 = vadd.f32 %v1104, %v1113
      %v1116 = vadd.f32 %v1105, %v1113
      %v1117 = vadd.f32 %v1106, %v1113
      %v1118 = vadd.f32 %v1107, %v1113
      %v1119 = vmax.f32 %v1115, 0.0
      %v1120 = vmax.f32 %v1116, 0.0
      %v1121 = vmax.f32 %v1117, 0.0
      %v1122 = vmax.f32 %v1118, 0.0
      %v1123 = vld [vmem:[%s11] sm:$0xff]
      %v1124 = vld [vmem:[%s11 + $0x8] sm:$0xff]
      %v1125 = vld [vmem:[%s11 + $0x10] sm:$0xff]
      %v1126 = vld [vmem:[%s11 + $0x18] sm:$0xff]
      %v1127 = vld [vmem:[%s12] sm:$0x1]
      %v1129 = vlaneseq
      %v1130 = vshrl.u32 %v1129, 7
      %v1131 = vsub.s32 0, %v1130
      %v1132 = vrot.slane %v1127, %v1131
      %v1135 = vsel %vm746, %v1119, 0
      %v1138 = vsel %vm746, %v1120, 0
      %v1141 = vsel %vm746, %v1121, 0
      %v1144 = vsel %vm746, %v1122, 0
      %1146 = vmatprep.subr.mxu0 0.0
      %1147 = vmatpush1.msra.mxu0 0.0
      %1148 = vmatprep.subr.mxu0 0.0
      %1149 = vmatpush1.msra.mxu0 0.0
      %1150 = vmatprep.subr.mxu0 0.0
      %1151 = vmatpush1.msra.mxu0 0.0
      %1152 = vmatprep.subr.mxu0 0.0
      %1153 = vmatpush1.msra.mxu0 0.0
      %1154 = vmatprep.subr.mxu0 0.0
      %1155 = vmatpush1.msra.mxu0 0.0
      %1156 = vmatprep.subr.mxu0 0.0
      %1157 = vmatpush1.msra.mxu0 0.0
      %1158 = vmatprep.subr.mxu0 0.0
      %1159 = vmatpush1.msra.mxu0 0.0
      %1160 = vmatprep.subr.mxu0 0.0
      %1161 = vmatpush1.msra.mxu0 0.0
      %1162 = vmatprep.subr.mxu0 0.0
      %1163 = vmatpush1.msra.mxu0 0.0
      %1164 = vmatprep.subr.mxu0 0.0
      %1165 = vmatpush1.msra.mxu0 0.0
      %1166 = vmatprep.subr.mxu0 0.0
      %1167 = vmatpush1.msra.mxu0 0.0
      %1168 = vmatprep.subr.mxu0 0.0
      %1169 = vmatpush1.msra.mxu0 0.0
      %1170 = vmatprep.subr.mxu0 0.0
      %1171 = vmatpush1.msra.mxu0 %v1126
      %1172 = vmatprep.subr.mxu0 0.0
      %1173 = vmatpush1.msra.mxu0 %v1125
      %1174 = vmatprep.subr.mxu0 0.0
      %1175 = vmatpush1.msra.mxu0 %v1124
      %1176 = vmatprep.subr.mxu0 0.0
      %1177 = vmatpush1.msra.mxu0 %v1123
      %1178 = vmatprep.subr.mxu0 0.0
      %1179 = vmatpush2.msra.mxu0 0.0
      %1180 = vmatprep.subr.mxu0 0.0
      %1181 = vmatpush2.msra.mxu0 0.0
      %1182 = vmatprep.subr.mxu0 0.0
      %1183 = vmatpush2.msra.mxu0 0.0
      %1184 = vmatprep.subr.mxu0 0.0
      %1185 = vmatpush2.msra.mxu0 0.0
      %1186 = vmatprep.subr.mxu0 0.0
      %1187 = vmatpush2.msra.mxu0 0.0
      %1188 = vmatprep.subr.mxu0 0.0
      %1189 = vmatpush2.msra.mxu0 0.0
      %1190 = vmatprep.subr.mxu0 0.0
      %1191 = vmatpush2.msra.mxu0 0.0
      %1192 = vmatprep.subr.mxu0 0.0
      %1193 = vmatpush2.msra.mxu0 0.0
      %1194 = vmatprep.subr.mxu0 0.0
      %1195 = vmatpush2.msra.mxu0 0.0
      %1196 = vmatprep.subr.mxu0 0.0
      %1197 = vmatpush2.msra.mxu0 0.0
      %1198 = vmatprep.subr.mxu0 0.0
      %1199 = vmatpush2.msra.mxu0 0.0
      %1200 = vmatprep.subr.mxu0 0.0
      %1201 = vmatpush2.msra.mxu0 0.0
      %1202 = vmatprep.subr.mxu0 0.0
      %1203 = vmatpush2.msra.mxu0 0.0
      %1204 = vmatprep.subr.mxu0 0.0
      %1205 = vmatpush2.msra.mxu0 0.0
      %1206 = vmatprep.subr.mxu0 0.0
      %1207 = vmatpush2.msra.mxu0 0.0
      %1208 = vmatprep.subr.mxu0 0.0
      %1209 = vmatpush2.msra.mxu0 0.0
      %1210 = vmatprep.mubr.f32.mxu0 0.0
      %1211 = vmatmul.mubr.f32.gmra.mxu0 %v1135
      %v1212 = vpop.f32.mrf.mxu0
      %v1213 = vadd.f32 %v1132, %v1212
      %v1214 = vpop.f32.mrf.mxu0
      %1215 = vmatprep.mubr.f32.mxu0 0.0
      %1216 = vmatmul.mubr.f32.gmra.mxu0 %v1138
      %v1217 = vpop.f32.mrf.mxu0
      %v1218 = vadd.f32 %v1132, %v1217
      %v1219 = vpop.f32.mrf.mxu0
      %1220 = vmatprep.mubr.f32.mxu0 0.0
      %1221 = vmatmul.mubr.f32.gmra.mxu0 %v1141
      %v1222 = vpop.f32.mrf.mxu0
      %v1223 = vadd.f32 %v1132, %v1222
      %v1224 = vpop.f32.mrf.mxu0
      %1225 = vmatprep.mubr.f32.mxu0 0.0
      %1226 = vmatmul.mubr.f32.gmra.mxu0 %v1144
      %v1227 = vpop.f32.mrf.mxu0
      %v1228 = vadd.f32 %v1132, %v1227
      %v1229 = vpop.f32.mrf.mxu0
      %1230 = vdwg.mxu0
      %v1231 = vmax.f32 %v1213, 0.0
      %v1232 = vmax.f32 %v1218, 0.0
      %v1233 = vmax.f32 %v1223, 0.0
      %v1234 = vmax.f32 %v1228, 0.0
      %v1235 = vld [vmem:[%s13] sm:$0xff]
      %v1236 = vld [vmem:[%s13 + $0x8] sm:$0xff]
      %v1237 = vld [vmem:[%s13 + $0x10] sm:$0xff]
      %v1238 = vld [vmem:[%s13 + $0x18] sm:$0xff]
      %v1239 = vld [vmem:[%s13 + $0x20] sm:$0xff]
      %v1240 = vld [vmem:[%s13 + $0x28] sm:$0xff]
      %v1241 = vld [vmem:[%s13 + $0x30] sm:$0xff]
      %v1242 = vld [vmem:[%s13 + $0x38] sm:$0xff]
      %v1243 = vld [vmem:[%s14] sm:$0x1]
      %v1245 = vlaneseq
      %v1246 = vshrl.u32 %v1245, 7
      %v1247 = vsub.s32 0, %v1246
      %v1248 = vrot.slane %v1243, %v1247
      %v1251 = vsel %vm633, %v1231, 0
      %v1254 = vsel %vm633, %v1232, 0
      %v1257 = vsel %vm633, %v1233, 0
      %v1260 = vsel %vm633, %v1234, 0
      %1262 = vmatprep.subr.mxu0 0.0
      %1263 = vmatpush1.msra.mxu0 0.0
      %1264 = vmatprep.subr.mxu0 0.0
      %1265 = vmatpush1.msra.mxu0 0.0
      %1266 = vmatprep.subr.mxu0 0.0
      %1267 = vmatpush1.msra.mxu0 0.0
      %1268 = vmatprep.subr.mxu0 0.0
      %1269 = vmatpush1.msra.mxu0 0.0
      %1270 = vmatprep.subr.mxu0 0.0
      %1271 = vmatpush1.msra.mxu0 0.0
      %1272 = vmatprep.subr.mxu0 0.0
      %1273 = vmatpush1.msra.mxu0 0.0
      %1274 = vmatprep.subr.mxu0 0.0
      %1275 = vmatpush1.msra.mxu0 0.0
      %1276 = vmatprep.subr.mxu0 0.0
      %1277 = vmatpush1.msra.mxu0 0.0
      %1278 = vmatprep.subr.mxu0 0.0
      %1279 = vmatpush1.msra.mxu0 %v1242
      %1280 = vmatprep.subr.mxu0 0.0
      %1281 = vmatpush1.msra.mxu0 %v1241
      %1282 = vmatprep.subr.mxu0 0.0
      %1283 = vmatpush1.msra.mxu0 %v1240
      %1284 = vmatprep.subr.mxu0 0.0
      %1285 = vmatpush1.msra.mxu0 %v1239
      %1286 = vmatprep.subr.mxu0 0.0
      %1287 = vmatpush1.msra.mxu0 %v1238
      %1288 = vmatprep.subr.mxu0 0.0
      %1289 = vmatpush1.msra.mxu0 %v1237
      %1290 = vmatprep.subr.mxu0 0.0
      %1291 = vmatpush1.msra.mxu0 %v1236
      %1292 = vmatprep.subr.mxu0 0.0
      %1293 = vmatpush1.msra.mxu0 %v1235
      %1294 = vmatprep.subr.mxu0 0.0
      %1295 = vmatpush2.msra.mxu0 0.0
      %1296 = vmatprep.subr.mxu0 0.0
      %1297 = vmatpush2.msra.mxu0 0.0
      %1298 = vmatprep.subr.mxu0 0.0
      %1299 = vmatpush2.msra.mxu0 0.0
      %1300 = vmatprep.subr.mxu0 0.0
      %1301 = vmatpush2.msra.mxu0 0.0
      %1302 = vmatprep.subr.mxu0 0.0
      %1303 = vmatpush2.msra.mxu0 0.0
      %1304 = vmatprep.subr.mxu0 0.0
      %1305 = vmatpush2.msra.mxu0 0.0
      %1306 = vmatprep.subr.mxu0 0.0
      %1307 = vmatpush2.msra.mxu0 0.0
      %1308 = vmatprep.subr.mxu0 0.0
      %1309 = vmatpush2.msra.mxu0 0.0
      %1310 = vmatprep.subr.mxu0 0.0
      %1311 = vmatpush2.msra.mxu0 0.0
      %1312 = vmatprep.subr.mxu0 0.0
      %1313 = vmatpush2.msra.mxu0 0.0
      %1314 = vmatprep.subr.mxu0 0.0
      %1315 = vmatpush2.msra.mxu0 0.0
      %1316 = vmatprep.subr.mxu0 0.0
      %1317 = vmatpush2.msra.mxu0 0.0
      %1318 = vmatprep.subr.mxu0 0.0
      %1319 = vmatpush2.msra.mxu0 0.0
      %1320 = vmatprep.subr.mxu0 0.0
      %1321 = vmatpush2.msra.mxu0 0.0
      %1322 = vmatprep.subr.mxu0 0.0
      %1323 = vmatpush2.msra.mxu0 0.0
      %1324 = vmatprep.subr.mxu0 0.0
      %1325 = vmatpush2.msra.mxu0 0.0
      %1326 = vmatprep.mubr.f32.mxu0 0.0
      %1327 = vmatmul.mubr.f32.gmra.mxu0 %v1251
      %v1328 = vpop.f32.mrf.mxu0
      %v1329 = vadd.f32 %v1248, %v1328
      %v1330 = vpop.f32.mrf.mxu0
      %1331 = vmatprep.mubr.f32.mxu0 0.0
      %1332 = vmatmul.mubr.f32.gmra.mxu0 %v1254
      %v1333 = vpop.f32.mrf.mxu0
      %v1334 = vadd.f32 %v1248, %v1333
      %v1335 = vpop.f32.mrf.mxu0
      %1336 = vmatprep.mubr.f32.mxu0 0.0
      %1337 = vmatmul.mubr.f32.gmra.mxu0 %v1257
      %v1338 = vpop.f32.mrf.mxu0
      %v1339 = vadd.f32 %v1248, %v1338
      %v1340 = vpop.f32.mrf.mxu0
      %1341 = vmatprep.mubr.f32.mxu0 0.0
      %1342 = vmatmul.mubr.f32.gmra.mxu0 %v1260
      %v1343 = vpop.f32.mrf.mxu0
      %v1344 = vadd.f32 %v1248, %v1343
      %v1345 = vpop.f32.mrf.mxu0
      %1346 = vdwg.mxu0
      %v1347 = vsub.f32 0.0, %v1329
      %v1348 = vsub.f32 0.0, %v1334
      %v1349 = vsub.f32 0.0, %v1339
      %v1350 = vsub.f32 0.0, %v1344
      %v1351 = vmul.f32 %v1347, 1.442695
      %v1352 = vpow.pop %v1351
      %v1353 = vmul.f32 %v1348, 1.442695
      %v1354 = vpow.pop %v1353
      %v1355 = vmul.f32 %v1349, 1.442695
      %v1356 = vpow.pop %v1355
      %v1357 = vmul.f32 %v1350, 1.442695
      %v1358 = vpow.pop %v1357
      %v1359 = vadd.f32 %v1352, 1.0
      %v1360 = vadd.f32 %v1354, 1.0
      %v1361 = vadd.f32 %v1356, 1.0
      %v1362 = vadd.f32 %v1358, 1.0
      %v1363 = vrcp.pop %v1359
      %v1364 = vmul.f32 1.0, %v1363
      %v1365 = vrcp.pop %v1360
      %v1366 = vmul.f32 1.0, %v1365
      %v1367 = vrcp.pop %v1361
      %v1368 = vmul.f32 1.0, %v1367
      %v1369 = vrcp.pop %v1362
      %v1370 = vmul.f32 1.0, %v1369
      %1375 = vrot.lane.b32.xlu0 %v960, 2
      %v1376 = vpop.permute.xlu0 %1375
      %1377 = vrot.lane.b32.xlu0 %v962, 2
      %v1378 = vpop.permute.xlu0 %1377
      %1379 = vrot.lane.b32.xlu0 %v964, 2
      %v1380 = vpop.permute.xlu0 %1379
      %1381 = vrot.lane.b32.xlu0 %v966, 2
      %v1382 = vpop.permute.xlu0 %1381
      %1387 = vrot.lane.b32.xlu0 %v960, 4
      %v1388 = vpop.permute.xlu0 %1387
      %1389 = vrot.lane.b32.xlu0 %v962, 4
      %v1390 = vpop.permute.xlu0 %1389
      %1391 = vrot.lane.b32.xlu0 %v964, 4
      %v1392 = vpop.permute.xlu0 %1391
      %1393 = vrot.lane.b32.xlu0 %v966, 4
      %v1394 = vpop.permute.xlu0 %1393
      %1399 = vrot.lane.b32.xlu0 %v1003, 8
      %v1400 = vpop.permute.xlu0 %1399
      %1401 = vrot.lane.b32.xlu0 %v1004, 8
      %v1402 = vpop.permute.xlu0 %1401
      %1403 = vrot.lane.b32.xlu0 %v1005, 8
      %v1404 = vpop.permute.xlu0 %1403
      %1405 = vrot.lane.b32.xlu0 %v1006, 8
      %v1406 = vpop.permute.xlu0 %1405
      %1411 = vrot.lane.b32.xlu0 %v1043, 8
      %v1412 = vpop.permute.xlu0 %1411
      %1413 = vrot.lane.b32.xlu0 %v1044, 8
      %v1414 = vpop.permute.xlu0 %1413
      %1415 = vrot.lane.b32.xlu0 %v1045, 8
      %v1416 = vpop.permute.xlu0 %1415
      %1417 = vrot.lane.b32.xlu0 %v1046, 8
      %v1418 = vpop.permute.xlu0 %1417
      %vm1423 = vcmask 31744
      %v1424 = vsel %vm1423, %v937, %v1376
      %v1425 = vsel %vm1423, %v942, %v1378
      %v1426 = vsel %vm1423, %v947, %v1380
      %v1427 = vsel %vm1423, %v952, %v1382
      %vm1428 = vcmask 39936
      %v1429 = vsel %vm1428, %v1424, 0.0
      %v1430 = vsel %vm1428, %v1425, 0.0
      %v1431 = vsel %vm1428, %v1426, 0.0
      %v1432 = vsel %vm1428, %v1427, 0.0
      %vm1433 = vcmask 48128
      %v1434 = vsel %vm1433, %v1429, %v937
      %v1435 = vsel %vm1433, %v1430, %v942
      %v1436 = vsel %vm1433, %v1431, %v947
      %v1437 = vsel %vm1433, %v1432, %v952
      %vm1438 = vcmask 56320
      %v1439 = vsel %vm1438, %v1434, %v1388
      %v1440 = vsel %vm1438, %v1435, %v1390
      %v1441 = vsel %vm1438, %v1436, %v1392
      %v1442 = vsel %vm1438, %v1437, %v1394
      %vm1443 = vcmask 64512
      %v1444 = vsel %vm1443, %v1439, %v1400
      %v1445 = vsel %vm1443, %v1440, %v1402
      %v1446 = vsel %vm1443, %v1441, %v1404
      %v1447 = vsel %vm1443, %v1442, %v1406
      %vm1448 = vcmask 72704
      %v1449 = vsel %vm1448, %v1444, %v1412
      %v1450 = vsel %vm1448, %v1445, %v1414
      %v1451 = vsel %vm1448, %v1446, %v1416
      %v1452 = vsel %vm1448, %v1447, %v1418
      %1457 = vrot.lane.b32.xlu0 %v1449, 100
      %v1458 = vpop.permute.xlu0 %1457
      %1459 = vrot.lane.b32.xlu0 %v1450, 100
      %v1460 = vpop.permute.xlu0 %1459
      %1461 = vrot.lane.b32.xlu0 %v1451, 100
      %v1462 = vpop.permute.xlu0 %1461
      %1463 = vrot.lane.b32.xlu0 %v1452, 100
      %v1464 = vpop.permute.xlu0 %1463
      %vm1469 = vcmask 818176
      %v1470 = vsel %vm1469, %v1364, %v1458
      %v1471 = vsel %vm1469, %v1366, %v1460
      %v1472 = vsel %vm1469, %v1368, %v1462
      %v1473 = vsel %vm1469, %v1370, %v1464
      %vm1474 = vcmask 900096
      %v1475 = vsel %vm1474, %v1470, %v1364
      %v1476 = vsel %vm1474, %v1471, %v1366
      %v1477 = vsel %vm1474, %v1472, %v1368
      %v1478 = vsel %vm1474, %v1473, %v1370
      %1479 = vst [vmem:[%s496] sm:$0xff] %v1475
      %1480 = vst [vmem:[%s496 + $0x8] sm:$0xff] %v1476
      %1481 = vst [vmem:[%s496 + $0x10] sm:$0xff] %v1477
      %1482 = vst [vmem:[%s496 + $0x18] sm:$0xff] %v1478
      %s1483 = smul.u32 4, %s26
      %p1484 = scmp.lt.s32.totalorder %s1483, 7
      %s1485 = scalar_select %p1484, %s1483, 7
      %s1486 = smul.addr %s1485, 8
      %s1487 = scalar_lea.vmem %s15, %s1486
      // Predicated region
      $region81: #{vae_forward.1} parent=79 // pred_check
        %p1488 = pneg %p364
      $region82: #{vae_forward.1} parent=79 // pred_check_branch
        %1490 = sbr.rel (%p1488) target = $region84
      $region83: #{vae_forward.1} parent=79 // pred_region
        %s1491 = smul.u32 4, %s26
      $region84: #{vae_forward.1} parent=79 // pred_fallthru
        _
    $region80: #{vae_forward.1} parent=5 // pred_fallthru
      _
    %p1492 = scmp.le.s32.totalorder 2, %s21
    // Predicated region
    $region85: #{vae_forward.1} parent=5 // pred_check
      %p1493 = pneg %p1492
    $region86: #{vae_forward.1} parent=5 // pred_check_branch
      %1495 = sbr.rel (%p1493) target = $region88
    $region87: #{vae_forward.1} parent=5 // pred_region
      %s1496 = ssub.s32 %s21, 2
      // Predicated region
      $region89: #{vae_forward.1} parent=87 // pred_check
        %p1497 = pneg %p370
      $region90: #{vae_forward.1} parent=87 // pred_check_branch
        %1499 = sbr.rel (%p1497) target = $region92
      $region91: #{vae_forward.1} parent=87 // pred_region
        %s1500 = smul.u32 4, %s27
        %p1501 = scmp.lt.s32.totalorder %s1500, 7
        %s1502 = scalar_select %p1501, %s1500, 7
        %s1503 = smul.addr %s1502, 8
        %s1504 = scalar_lea.vmem %s15, %s1503
      $region92: #{vae_forward.1} parent=87 // pred_fallthru
        _
    $region88: #{vae_forward.1} parent=5 // pred_fallthru
      _
  $region6: #{vae_forward.1} parent=0 // loop_footer
    %s25 = sadd.s32 1, %s21
  $region7: #{vae_forward.1} parent=0 // loop_footer_branch
    %20 = sbr.rel target = $region3
  $region8: #{vae_forward.1} parent=0 // loop_exit
    _

</llo_original>
